<compile_context>
chip_gen: v5e
topology: v5e:2x2
jax: 0.10.0
libtpu: 0.0.40
codegen_flags: <defaults>
</compile_context>

<pallas_src>
import functools

import jax
import jax.numpy as jnp
from jax.experimental import pallas as pl
from jax.experimental.pallas import tpu as pltpu

LANE = 128


def _round_up(v, m):
    return (v + m - 1) // m * m


def _fused_kernel(x_ref, mask_ref, wconv_ref, bconv_ref, whead_ref, bhead_ref,
                  o_ref, pool_acc, *, W, TH, pad_top, hw, n_pad_pos):
    """conv3x3(same) + bias + ReLU + global-avg-pool + linear head, fused.

    Grid = (N/B, S).  For a batch-tile of B samples, spatial row-tiles
    t = 0..S-1 accumulate the pooled feature sum in `pool_acc`; the head
    matmul runs on the last tile.

    x_ref     : (B, L, Cin)        f32   flat (H, W+2) spatial, zero-padded, resident
    mask_ref  : (RF, 1)            f32   validity of each computed position (tile t)
    wconv_ref : (9*Cin, hid_p)     bf16
    bconv_ref : (1, hid_p)         f32
    whead_ref : (hid_p, cls_p)     bf16
    bhead_ref : (1, cls_p)         f32
    o_ref     : (B, cls_p)         f32
    pool_acc  : (B, hid_p)         f32   VMEM scratch (pool-sum accumulator)
    """
    t = pl.program_id(1)

    @pl.when(t == 0)
    def _():
        pool_acc[...] = jnp.zeros_like(pool_acc)

    B, _, C = x_ref.shape
    Wp = W + 2
    RF = TH * Wp                      # flat computed positions per tile
    hid = wconv_ref.shape[-1]
    base = pad_top + t * RF           # flat index of this tile's first position

    # Build the (B, RF, 9*Cin) im2col LHS in registers/VMEM from 9 shifted
    # windows of the resident flat sample (never touches HBM).  Out-of-image
    # taps read the zero padding; invalid computed positions (padded columns /
    # remainder rows) are zeroed by the mask so they contribute exactly
    # ReLU(bias) after the conv -- corrected in closed form at finalize.
    wins = []
    for di in range(3):
        for dj in range(3):
            start = base + (di - 1) * Wp + (dj - 1)
            wins.append(x_ref[:, pl.ds(start, RF), :])       # (B, RF, Cin) f32
    lhs = jnp.concatenate(wins, axis=-1) * mask_ref[...]      # (B, RF, 9*Cin)
    lhs = lhs.astype(jnp.bfloat16).reshape(B * RF, 9 * C)

    # ONE MXU matmul with K = 9*Cin (vs. 9 tiny K=Cin matmuls before).
    acc = jnp.dot(lhs, wconv_ref[...], preferred_element_type=jnp.float32)
    feat = jnp.maximum(acc + bconv_ref[...], 0.0)             # (B*RF, hid) f32

    pool_acc[...] += jnp.sum(feat.reshape(B, RF, hid), axis=1)

    @pl.when(t == pl.num_programs(1) - 1)
    def _():
        # Every masked/padded position contributed exactly ReLU(bias); remove
        # them with a scalar count and finish the global average pool + head.
        relu_b = jnp.maximum(bconv_ref[...], 0.0)             # (1, hid)
        pooled = (pool_acc[...] - float(n_pad_pos) * relu_b) * (1.0 / float(hw))
        logits = jnp.dot(pooled.astype(jnp.bfloat16), whead_ref[...],
                         preferred_element_type=jnp.float32) + bhead_ref[...]
        o_ref[...] = logits.astype(o_ref.dtype)


@functools.partial(jax.jit, static_argnames=("tile_h", "batch_tile"))
def base_model_forward(x_nchw, w_conv, b_conv, w_head, b_head,
                       tile_h=8, batch_tile=8):
    # NCHW (PyTorch convention) -> NHWC so channels map to the 128-lane axis.
    x = jnp.transpose(x_nchw, (0, 2, 3, 1)).astype(jnp.float32)
    N, H, W, C = x.shape
    K9, hidden = w_conv.shape
    assert K9 == 9 * C, (K9, C)
    ncls = w_head.shape[1]

    # Lane-dense padding: hidden & num_classes -> multiples of 128.  Padded
    # channels/classes are exact zeros end-to-end; sliced off below.
    hid_p = _round_up(hidden, LANE)
    cls_p = _round_up(ncls, LANE)

    wc = jnp.pad(w_conv, ((0, 0), (0, hid_p - hidden))).astype(jnp.bfloat16)
    bc = jnp.pad(b_conv, ((0, 0), (0, hid_p - hidden)))                          # f32
    wh = jnp.pad(w_head, ((0, hid_p - hidden), (0, cls_p - ncls))).astype(jnp.bfloat16)
    bh = jnp.pad(b_head, ((0, 0), (0, cls_p - ncls)))                            # f32

    # Spatial row tiling (reduction axis): bounds the per-step (TH*(W+2), hid_p)
    # feature chunk.  Raise tile_h on v5e/v6e (128 MiB VMEM); keep 8-16 on v7x.
    th = min(tile_h, H)
    S = pl.cdiv(H, th)
    Wp = W + 2
    RF = th * Wp                       # computed flat positions per tile
    core = S * RF                      # computed flat positions per sample
    hw = H * W                         # valid positions per sample

    # Flat (H, W+2) layout with two zero columns per row: horizontal
    # out-of-image taps read zeros automatically.  Zero rows above/below cover
    # the vertical taps and the remainder rows of the last tile.
    pad_top = _round_up(W + 3, 8)      # sublane-aligned leading pad
    pad_bot = _round_up(W + 3, 8)
    L = pad_top + core + pad_bot

    # Batch tiling across samples (sublane-dense stores, M=B head matmul,
    # fewer grid steps).  For v7x choose batch_tile <= N/2 to feed both TCs.
    B = max(1, min(batch_tile, N))
    Np = _round_up(N, B)

    xw = jnp.pad(x, ((0, Np - N), (0, 0), (0, 2), (0, 0)))     # (Np, H, W+2, C)
    x_flat = xw.reshape(Np, H * Wp, C)
    xp = jnp.pad(x_flat, ((0, 0), (pad_top, L - pad_top - H * Wp), (0, 0)))

    # Per-tile validity mask over computed positions: 1 where the position maps
    # to a real pixel (row < H and column < W), else 0.
    q = jnp.arange(core, dtype=jnp.int32)
    valid = ((q // Wp) < H) & ((q % Wp) < W)
    mask = valid.astype(jnp.float32).reshape(S, RF, 1)

    kernel = functools.partial(_fused_kernel, W=W, TH=th, pad_top=pad_top,
                               hw=hw, n_pad_pos=core - hw)
    logits_p = pl.pallas_call(
        kernel,
        out_shape=jax.ShapeDtypeStruct((Np, cls_p), jnp.float32),
        grid_spec=pltpu.PrefetchScalarGridSpec(
            num_scalar_prefetch=0,
            grid=(Np // B, S),
            in_specs=[
                # The B flat samples stay VMEM-resident across their S row
                # tiles (block index constant in t -> no re-DMA per tile).
                pl.BlockSpec((B, L, C), lambda n, t: (n, 0, 0)),
                pl.BlockSpec((None, RF, 1), lambda n, t: (t, 0, 0)),
                pl.BlockSpec((K9, hid_p), lambda n, t: (0, 0)),
                pl.BlockSpec((1, hid_p), lambda n, t: (0, 0)),
                pl.BlockSpec((hid_p, cls_p), lambda n, t: (0, 0)),
                pl.BlockSpec((1, cls_p), lambda n, t: (0, 0)),
            ],
            out_specs=pl.BlockSpec((B, cls_p), lambda n, t: (n, 0)),
            scratch_shapes=[pltpu.VMEM((B, hid_p), jnp.float32)],
        ),
        compiler_params=pltpu.CompilerParams(
            dimension_semantics=("parallel", "arbitrary"),
            vmem_limit_bytes=64 * 1024 * 1024,
        ),
    )(xp, mask, wc, bc, wh, bh)

    # TODO(synk): for real backbone channel counts (Cin >= 256) add a K grid
    # axis over Cin with an f32 VMEM accumulator instead of a full 9*Cin LHS.
    return logits_p[:N, :ncls]


def make_params(key, cin, hidden, num_classes):
    k1, k2, k3, k4 = jax.random.split(key, 4)
    K = 9 * cin
    w_conv = jax.random.normal(k1, (K, hidden), jnp.float32) * 0.05
    b_conv = jax.random.normal(k2, (1, hidden), jnp.float32) * 0.01
    w_head = jax.random.normal(k3, (hidden, num_classes), jnp.float32) * 0.05
    b_head = jax.random.normal(k4, (1, num_classes), jnp.float32) * 0.01
    return w_conv, b_conv, w_head, b_head


def reference_forward(x_nchw, w_conv, b_conv, w_head, b_head):
    """Pure-JAX reference (f32 end to end) for correctness checking."""
    x = jnp.transpose(x_nchw, (0, 2, 3, 1)).astype(jnp.float32)
    N, H, W, C = x.shape
    xp = jnp.pad(x, ((0, 0), (1, 1), (1, 1), (0, 0)))
    patches = jnp.concatenate(
        [xp[:, di:di + H, dj:dj + W, :] for di in range(3) for dj in range(3)],
        axis=-1).reshape(N, H * W, 9 * C)
    feat = jnp.maximum(patches @ w_conv + b_conv, 0.0)
    pooled = feat.mean(axis=1)
    return pooled @ w_head + b_head


if __name__ == "__main__":
    key = jax.random.PRNGKey(0)
    kx, kp = jax.random.split(key)

    N, C, H, W = 2, 4, 16, 16
    hidden, num_classes = 32, 8

    x = jax.random.normal(kx, (N, C, H, W), jnp.float32)
    w_conv, b_conv, w_head, b_head = make_params(kp, C, hidden, num_classes)

    out = base_model_forward(x, w_conv, b_conv, w_head, b_head)
    out = jax.block_until_ready(out)

    assert out.shape == (N, num_classes), out.shape
    assert out.dtype == jnp.float32, out.dtype

    ref = reference_forward(x, w_conv, b_conv, w_head, b_head)
    max_err = float(jnp.max(jnp.abs(out - ref)))
    assert jnp.allclose(out, ref, atol=2e-2, rtol=2e-2), max_err

    print("KERNEL_OK")
</pallas_src>

<mosaic_0001>
module attributes {stable_mosaic.version = 11 : i64} {
  func.func @_fused_kernel(%arg0: i32, %arg1: i32, %arg2: memref<2x336x4xf32, #tpu.memory_space<vmem>>, %arg3: memref<1x144x1xf32, #tpu.memory_space<vmem>>, %arg4: memref<36x128xbf16, #tpu.memory_space<vmem>>, %arg5: memref<1x128xf32, #tpu.memory_space<vmem>>, %arg6: memref<128x128xbf16, #tpu.memory_space<vmem>>, %arg7: memref<1x128xf32, #tpu.memory_space<vmem>>, %arg8: memref<2x128xf32, #tpu.memory_space<vmem>>, %arg9: memref<2x128xf32, #tpu.memory_space<vmem>>) attributes {dimension_semantics = [#tpu.dimension_semantics<parallel>, #tpu.dimension_semantics<arbitrary>], iteration_bounds = array<i64: 1, 2>, scalar_prefetch = 0 : i64, scratch_operands = 1 : i64, tpu.core_type = #tpu.core_type<tc>, window_params = [{transform_indices = @transform_0, window_bounds = array<i64: 2, 336, 4>}, {transform_indices = @transform_1, window_bounds = array<i64: 1, 144, 1>}, {pipeline_mode = #tpu.pipeline_mode<synchronous>, transform_indices = @transform_2, window_bounds = array<i64: 36, 128>}, {pipeline_mode = #tpu.pipeline_mode<synchronous>, transform_indices = @transform_3, window_bounds = array<i64: 1, 128>}, {pipeline_mode = #tpu.pipeline_mode<synchronous>, transform_indices = @transform_4, window_bounds = array<i64: 128, 128>}, {pipeline_mode = #tpu.pipeline_mode<synchronous>, transform_indices = @transform_5, window_bounds = array<i64: 1, 128>}, {transform_indices = @transform_6, window_bounds = array<i64: 2, 128>}]} {
    %c0_i32 = arith.constant 0 : i32
    %0 = arith.cmpi eq, %arg1, %c0_i32 : i32
    %1 = arith.extui %0 : i1 to i32
    %c0_i32_0 = arith.constant 0 : i32
    %2 = arith.cmpi ne, %1, %c0_i32_0 : i32
    scf.if %2 {
      %cst_47 = arith.constant 0.000000e+00 : f32
      %64 = vector.broadcast %cst_47 : f32 to vector<2x128xf32>
      %c0_48 = arith.constant 0 : index
      %c0_49 = arith.constant 0 : index
      %65 = vector.load %arg9[%c0_48, %c0_49] : memref<2x128xf32, #tpu.memory_space<vmem>>, vector<2x128xf32>
      tpu.vector_store %arg9[%c0_48, %c0_49], %64 {strides = array<i32>} : memref<2x128xf32, #tpu.memory_space<vmem>>, vector<2x128xf32>,
    } else {
    }
    %c144_i32 = arith.constant 144 : i32
    %3 = arith.muli %arg1, %c144_i32 : i32
    %c24_i32 = arith.constant 24 : i32
    %4 = arith.addi %c24_i32, %3 : i32
    %c-18_i32 = arith.constant -18 : i32
    %5 = arith.addi %4, %c-18_i32 : i32
    %c-1_i32 = arith.constant -1 : i32
    %6 = arith.addi %5, %c-1_i32 : i32
    %c0 = arith.constant 0 : index
    %7 = arith.index_cast %6 : i32 to index
    %c0_1 = arith.constant 0 : index
    %8 = vector.load %arg2[%c0, %7, %c0_1] : memref<2x336x4xf32, #tpu.memory_space<vmem>>, vector<2x144x4xf32>
    %c-18_i32_2 = arith.constant -18 : i32
    %9 = arith.addi %4, %c-18_i32_2 : i32
    %c0_i32_3 = arith.constant 0 : i32
    %10 = arith.addi %9, %c0_i32_3 : i32
    %c0_4 = arith.constant 0 : index
    %11 = arith.index_cast %10 : i32 to index
    %c0_5 = arith.constant 0 : index
    %12 = vector.load %arg2[%c0_4, %11, %c0_5] : memref<2x336x4xf32, #tpu.memory_space<vmem>>, vector<2x144x4xf32>
    %c-18_i32_6 = arith.constant -18 : i32
    %13 = arith.addi %4, %c-18_i32_6 : i32
    %c1_i32 = arith.constant 1 : i32
    %14 = arith.addi %13, %c1_i32 : i32
    %c0_7 = arith.constant 0 : index
    %15 = arith.index_cast %14 : i32 to index
    %c0_8 = arith.constant 0 : index
    %16 = vector.load %arg2[%c0_7, %15, %c0_8] : memref<2x336x4xf32, #tpu.memory_space<vmem>>, vector<2x144x4xf32>
    %c0_i32_9 = arith.constant 0 : i32
    %17 = arith.addi %4, %c0_i32_9 : i32
    %c-1_i32_10 = arith.constant -1 : i32
    %18 = arith.addi %17, %c-1_i32_10 : i32
    %c0_11 = arith.constant 0 : index
    %19 = arith.index_cast %18 : i32 to index
    %c0_12 = arith.constant 0 : index
    %20 = vector.load %arg2[%c0_11, %19, %c0_12] : memref<2x336x4xf32, #tpu.memory_space<vmem>>, vector<2x144x4xf32>
    %c0_i32_13 = arith.constant 0 : i32
    %21 = arith.addi %4, %c0_i32_13 : i32
    %c0_i32_14 = arith.constant 0 : i32
    %22 = arith.addi %21, %c0_i32_14 : i32
    %c0_15 = arith.constant 0 : index
    %23 = arith.index_cast %22 : i32 to index
    %c0_16 = arith.constant 0 : index
    %24 = vector.load %arg2[%c0_15, %23, %c0_16] : memref<2x336x4xf32, #tpu.memory_space<vmem>>, vector<2x144x4xf32>
    %c0_i32_17 = arith.constant 0 : i32
    %25 = arith.addi %4, %c0_i32_17 : i32
    %c1_i32_18 = arith.constant 1 : i32
    %26 = arith.addi %25, %c1_i32_18 : i32
    %c0_19 = arith.constant 0 : index
    %27 = arith.index_cast %26 : i32 to index
    %c0_20 = arith.constant 0 : index
    %28 = vector.load %arg2[%c0_19, %27, %c0_20] : memref<2x336x4xf32, #tpu.memory_space<vmem>>, vector<2x144x4xf32>
    %c18_i32 = arith.constant 18 : i32
    %29 = arith.addi %4, %c18_i32 : i32
    %c-1_i32_21 = arith.constant -1 : i32
    %30 = arith.addi %29, %c-1_i32_21 : i32
    %c0_22 = arith.constant 0 : index
    %31 = arith.index_cast %30 : i32 to index
    %c0_23 = arith.constant 0 : index
    %32 = vector.load %arg2[%c0_22, %31, %c0_23] : memref<2x336x4xf32, #tpu.memory_space<vmem>>, vector<2x144x4xf32>
    %c18_i32_24 = arith.constant 18 : i32
    %33 = arith.addi %4, %c18_i32_24 : i32
    %c0_i32_25 = arith.constant 0 : i32
    %34 = arith.addi %33, %c0_i32_25 : i32
    %c0_26 = arith.constant 0 : index
    %35 = arith.index_cast %34 : i32 to index
    %c0_27 = arith.constant 0 : index
    %36 = vector.load %arg2[%c0_26, %35, %c0_27] : memref<2x336x4xf32, #tpu.memory_space<vmem>>, vector<2x144x4xf32>
    %c18_i32_28 = arith.constant 18 : i32
    %37 = arith.addi %4, %c18_i32_28 : i32
    %c1_i32_29 = arith.constant 1 : i32
    %38 = arith.addi %37, %c1_i32_29 : i32
    %c0_30 = arith.constant 0 : index
    %39 = arith.index_cast %38 : i32 to index
    %c0_31 = arith.constant 0 : index
    %40 = vector.load %arg2[%c0_30, %39, %c0_31] : memref<2x336x4xf32, #tpu.memory_space<vmem>>, vector<2x144x4xf32>
    %41 = tpu.concatenate %8, %12, %16, %20, %24, %28, %32, %36, %40 in 2 : vector<2x144x4xf32>, vector<2x144x4xf32>, vector<2x144x4xf32>, vector<2x144x4xf32>, vector<2x144x4xf32>, vector<2x144x4xf32>, vector<2x144x4xf32>, vector<2x144x4xf32>, vector<2x144x4xf32> -> vector<2x144x36xf32>
    %c0_32 = arith.constant 0 : index
    %c0_33 = arith.constant 0 : index
    %c0_34 = arith.constant 0 : index
    %42 = vector.load %arg3[%c0_32, %c0_33, %c0_34] : memref<1x144x1xf32, #tpu.memory_space<vmem>>, vector<1x144x1xf32>
    %43 = vector.shape_cast %42 : vector<1x144x1xf32> to vector<144x1xf32>
    %44 = vector.shape_cast %43 : vector<144x1xf32> to vector<1x144x1xf32>
    %45 = vector.broadcast %44 : vector<1x144x1xf32> to vector<2x144x36xf32>
    %46 = arith.mulf %41, %45 : vector<2x144x36xf32>
    %47 = arith.truncf %46 : vector<2x144x36xf32> to vector<2x144x36xbf16>
    %48 = vector.shape_cast %47 : vector<2x144x36xbf16> to vector<288x36xbf16>
    %c0_35 = arith.constant 0 : index
    %c0_36 = arith.constant 0 : index
    %49 = vector.load %arg4[%c0_35, %c0_36] : memref<36x128xbf16, #tpu.memory_space<vmem>>, vector<36x128xbf16>
    %cst = arith.constant dense<0.000000e+00> : vector<288x128xf32>
    %50 = tpu.matmul %48, %49, %cst {dimension_numbers = #tpu.dot_dimension_numbers<[1], [0], [0], [1], [0, 0, 1, 1], [], []>} : vector<288x36xbf16>, vector<36x128xbf16>, vector<288x128xf32> -> vector<288x128xf32>
    %c0_37 = arith.constant 0 : index
    %c0_38 = arith.constant 0 : index
    %51 = vector.load %arg5[%c0_37, %c0_38] : memref<1x128xf32, #tpu.memory_space<vmem>>, vector<1x128xf32>
    %52 = vector.broadcast %51 : vector<1x128xf32> to vector<288x128xf32>
    %53 = arith.addf %50, %52 : vector<288x128xf32>
    %cst_39 = arith.constant 0.000000e+00 : f32
    %54 = vector.broadcast %cst_39 : f32 to vector<288x128xf32>
    %55 = arith.maximumf %53, %54 : vector<288x128xf32>
    %c0_40 = arith.constant 0 : index
    %c0_41 = arith.constant 0 : index
    %56 = vector.load %arg9[%c0_40, %c0_41] : memref<2x128xf32, #tpu.memory_space<vmem>>, vector<2x128xf32>
    %57 = vector.shape_cast %55 : vector<288x128xf32> to vector<2x144x128xf32>
    %cst_42 = arith.constant dense<0.000000e+00> : vector<2x128xf32>
    %58 = vector.multi_reduction <add>, %57, %cst_42 [1] : vector<2x144x128xf32> to vector<2x128xf32>
    %59 = arith.addf %56, %58 : vector<2x128xf32>
    %c0_43 = arith.constant 0 : index
    %c0_44 = arith.constant 0 : index
    %60 = vector.load %arg9[%c0_43, %c0_44] : memref<2x128xf32, #tpu.memory_space<vmem>>, vector<2x128xf32>
    tpu.vector_store %arg9[%c0_43, %c0_44], %59 {strides = array<i32>} : memref<2x128xf32, #tpu.memory_space<vmem>>, vector<2x128xf32>,
    %c1_i32_45 = arith.constant 1 : i32
    %61 = arith.cmpi eq, %arg1, %c1_i32_45 : i32
    %62 = arith.extui %61 : i1 to i32
    %c0_i32_46 = arith.constant 0 : i32
    %63 = arith.cmpi ne, %62, %c0_i32_46 : i32
    scf.if %63 {
      %c0_47 = arith.constant 0 : index
      %c0_48 = arith.constant 0 : index
      %64 = vector.load %arg5[%c0_47, %c0_48] : memref<1x128xf32, #tpu.memory_space<vmem>>, vector<1x128xf32>
      %cst_49 = arith.constant 0.000000e+00 : f32
      %65 = vector.broadcast %cst_49 : f32 to vector<1x128xf32>
      %66 = arith.maximumf %64, %65 : vector<1x128xf32>
      %c0_50 = arith.constant 0 : index
      %c0_51 = arith.constant 0 : index
      %67 = vector.load %arg9[%c0_50, %c0_51] : memref<2x128xf32, #tpu.memory_space<vmem>>, vector<2x128xf32>
      %cst_52 = arith.constant 3.200000e+01 : f32
      %68 = vector.broadcast %cst_52 : f32 to vector<1x128xf32>
      %69 = arith.mulf %68, %66 : vector<1x128xf32>
      %70 = vector.broadcast %69 : vector<1x128xf32> to vector<2x128xf32>
      %71 = arith.subf %67, %70 : vector<2x128xf32>
      %cst_53 = arith.constant 3.906250e-03 : f32
      %72 = vector.broadcast %cst_53 : f32 to vector<2x128xf32>
      %73 = arith.mulf %71, %72 : vector<2x128xf32>
      %74 = arith.truncf %73 : vector<2x128xf32> to vector<2x128xbf16>
      %c0_54 = arith.constant 0 : index
      %c0_55 = arith.constant 0 : index
      %75 = vector.load %arg6[%c0_54, %c0_55] : memref<128x128xbf16, #tpu.memory_space<vmem>>, vector<128x128xbf16>
      %cst_56 = arith.constant dense<0.000000e+00> : vector<2x128xf32>
      %76 = tpu.matmul %74, %75, %cst_56 {dimension_numbers = #tpu.dot_dimension_numbers<[1], [0], [0], [1], [0, 0, 1, 1], [], []>} : vector<2x128xbf16>, vector<128x128xbf16>, vector<2x128xf32> -> vector<2x128xf32>
      %c0_57 = arith.constant 0 : index
      %c0_58 = arith.constant 0 : index
      %77 = vector.load %arg7[%c0_57, %c0_58] : memref<1x128xf32, #tpu.memory_space<vmem>>, vector<1x128xf32>
      %78 = vector.broadcast %77 : vector<1x128xf32> to vector<2x128xf32>
      %79 = arith.addf %76, %78 : vector<2x128xf32>
      %c0_59 = arith.constant 0 : index
      %c0_60 = arith.constant 0 : index
      %80 = vector.load %arg8[%c0_59, %c0_60] : memref<2x128xf32, #tpu.memory_space<vmem>>, vector<2x128xf32>
      tpu.vector_store %arg8[%c0_59, %c0_60], %79 {strides = array<i32>} : memref<2x128xf32, #tpu.memory_space<vmem>>, vector<2x128xf32>,
    } else {
    }
    return
  }
  func.func @transform_0(%arg0: i32, %arg1: i32) -> (i32, i32, i32) {
    %c0_i32 = arith.constant 0 : i32
    %c0_i32_0 = arith.constant 0 : i32
    %c0_i32_1 = arith.constant 0 : i32
    return %arg0, %c0_i32, %c0_i32_0 : i32, i32, i32
  }
  func.func @transform_1(%arg0: i32, %arg1: i32) -> (i32, i32, i32) {
    %c0_i32 = arith.constant 0 : i32
    %c0_i32_0 = arith.constant 0 : i32
    %c0_i32_1 = arith.constant 0 : i32
    return %arg1, %c0_i32, %c0_i32_0 : i32, i32, i32
  }
  func.func @transform_2(%arg0: i32, %arg1: i32) -> (i32, i32) {
    %c0_i32 = arith.constant 0 : i32
    %c0_i32_0 = arith.constant 0 : i32
    %c0_i32_1 = arith.constant 0 : i32
    return %c0_i32, %c0_i32_0 : i32, i32
  }
  func.func @transform_3(%arg0: i32, %arg1: i32) -> (i32, i32) {
    %c0_i32 = arith.constant 0 : i32
    %c0_i32_0 = arith.constant 0 : i32
    %c0_i32_1 = arith.constant 0 : i32
    return %c0_i32, %c0_i32_0 : i32, i32
  }
  func.func @transform_4(%arg0: i32, %arg1: i32) -> (i32, i32) {
    %c0_i32 = arith.constant 0 : i32
    %c0_i32_0 = arith.constant 0 : i32
    %c0_i32_1 = arith.constant 0 : i32
    return %c0_i32, %c0_i32_0 : i32, i32
  }
  func.func @transform_5(%arg0: i32, %arg1: i32) -> (i32, i32) {
    %c0_i32 = arith.constant 0 : i32
    %c0_i32_0 = arith.constant 0 : i32
    %c0_i32_1 = arith.constant 0 : i32
    return %c0_i32, %c0_i32_0 : i32, i32
  }
  func.func @transform_6(%arg0: i32, %arg1: i32) -> (i32, i32) {
    %c0_i32 = arith.constant 0 : i32
    %c0_i32_0 = arith.constant 0 : i32
    return %arg0, %c0_i32 : i32, i32
  }
}

</mosaic_0001>

<llo_original>
// kernel: base_model_forward.1
$region0: #{base_model_forward.1}
  #allocation0 [shape = 'u32[]', space=smem, size = 0x4, offset = 0x4, fixed_abs, tag = 'smem constant byte address 0x4 - core index']
  #allocation1 [shape = 'u32[72,128]{1,0:T(1,128)}', space=vmem, size = 0x9000, scoped, tag = 'internal scratch']
  #allocation2 [shape = 'f32[2,128]{1,0:T(2,128)}', space=vmem, size = 0x400, scoped, tag = 'scratch operand']
  %s0 = inlined_call_operand.vmem [shape: f32[2,336,4], index: 0, kind: input, shape index: {}]
  %s1 = inlined_call_operand.vmem [shape: f32[2,144,1], index: 1, kind: input, shape index: {}]
  %s2 = inlined_call_operand.vmem [shape: bf16[36,128], index: 2, kind: input, shape index: {}]
  %s3 = inlined_call_operand.vmem [shape: f32[1,128], index: 3, kind: input, shape index: {}]
  %s4 = inlined_call_operand.vmem [shape: bf16[128,128], index: 4, kind: input, shape index: {}]
  %s5 = inlined_call_operand.vmem [shape: f32[1,128], index: 5, kind: input, shape index: {}]
  %s6 = inlined_call_operand.hbm [shape: f32[2,128], index: 6, kind: output, shape index: {}]
  %s7 = sld [smem:[#allocation0]]
  $region65: #{base_model_forward.1} parent=0
    _
  %s9 = ssub.s32 1, %s7
  %s10 = scalar_select 0, %s9, %s7
  $region1: #{base_model_forward.1} parent=0
    #allocation3 [shape = 'u8[1024]{0}', space=vmem, size = 0x400, scoped, tag = 'output window, operand 0, single buffered']
    #allocation4 [shape = 's32[2]{0}', space=sflag, size = 0x8, scoped, tag = 'scoped memory for base_model_forward.1']
    %11 = vsyncpa [#allocation4], 0
    loop: start=0, step=1, limit=4
    $region2: #{base_model_forward.1} parent=1 // loop_pre_header
      _
    $region3: #{base_model_forward.1} parent=1 // loop_header
      %s13 = sphi 0, %s17
      %p14 = scmp.ge.s32.totalorder %s13, 4
      %s20 = sphi 0, %s32
      %s21 = sphi 0, %s28
      %s22 = sphi 0, %s20
      %s23 = sphi 0, %s21
      %s24 = sphi 0, %s22
      %s25 = sphi 0, %s23
      %s35 = sphi 0, %s37
      %s38 = sphi 0, %s35
      %s39 = sphi 0, %s38
      %s55 = sphi 0, %s39
      %s61 = sphi 0, %s63
      %s64 = sphi 0, %s61
      %s65 = sphi 0, %s64
      %s81 = sphi 0, %s65
      %s85 = sphi 0, %s85
      %s87 = sphi 0, %s85
      %s88 = sphi 0, %s87
      %s102 = sphi 0, %s88
      %s106 = sphi 0, %s106
      %s108 = sphi 0, %s106
      %s109 = sphi 0, %s108
      %s123 = sphi 0, %s109
      %s127 = sphi 0, %s127
      %s129 = sphi 0, %s127
      %s130 = sphi 0, %s129
      %s144 = sphi 0, %s130
      %s148 = sphi 0, %s148
      %s150 = sphi 0, %s148
      %s151 = sphi 0, %s150
      %s165 = sphi 0, %s151
      %s171 = sphi 0, %s173
      %s174 = sphi 0, %s171
      %s175 = sphi 0, %s174
      %s191 = sphi 0, %s175
    $region4: #{base_model_forward.1} parent=1 // loop_header_branch
      %16 = sbr.rel (%p14) target = $region8
    $region5: #{base_model_forward.1} parent=1 // loop_body
      %s18 = ssub.s32 %s13, 1
      %s19 = ssub.s32 %s13, 2
      %s26 = sadd.s32 1, %s21
      %p27 = scmp.ge.s32.totalorder %s26, 2
      %s28 = scalar_select %p27, 0, %s26
      %s29 = sadd.s32 1, %s20
      %s30 = scalar_select %p27, %s29, %s20
      %p31 = scmp.ge.s32.totalorder %s30, 1
      %s32 = scalar_select %p31, 0, %s30
      %s33 = ssub.s32 %s20, %s32
      %p34 = scmp.eq.s32.totalorder %s33, 0
      %s36 = sadd.s32 %s35, 1
      %s37 = scalar_select %p34, %s35, %s36
      %p40 = pneg %p34
      %p41 = scmp.eq.s32.totalorder %s13, 1
      %p42 = por %p40, %p41
      %p43 = scmp.ne.s32.totalorder %s35, %s38
      %p44 = scmp.eq.s32.totalorder %s13, 0
      %p45 = por %p43, %p44
      %p46 = scmp.ne.s32.totalorder %s35, %s38
      %p47 = scmp.eq.s32.totalorder %s18, 1
      %p48 = por %p46, %p47
      %p49 = scmp.ne.s32.totalorder %s38, %s39
      %p50 = scmp.eq.s32.totalorder %s18, 0
      %p51 = por %p49, %p50
      %p52 = scmp.ne.s32.totalorder %s38, %s39
      %p53 = scmp.eq.s32.totalorder %s19, 1
      %p54 = por %p52, %p53
      %p56 = scmp.ne.s32.totalorder %s39, %s55
      %p57 = scmp.eq.s32.totalorder %s19, 0
      %p58 = por %p56, %p57
      %s59 = ssub.s32 %s21, %s28
      %p60 = scmp.eq.s32.totalorder %s59, 0
      %s62 = sadd.s32 %s61, 1
      %s63 = scalar_select %p60, %s61, %s62
      %p66 = pneg %p60
      %p67 = scmp.eq.s32.totalorder %s13, 1
      %p68 = por %p66, %p67
      %p69 = scmp.ne.s32.totalorder %s61, %s64
      %p70 = scmp.eq.s32.totalorder %s13, 0
      %p71 = por %p69, %p70
      %p72 = scmp.ne.s32.totalorder %s61, %s64
      %p73 = scmp.eq.s32.totalorder %s18, 1
      %p74 = por %p72, %p73
      %p75 = scmp.ne.s32.totalorder %s64, %s65
      %p76 = scmp.eq.s32.totalorder %s18, 0
      %p77 = por %p75, %p76
      %p78 = scmp.ne.s32.totalorder %s64, %s65
      %p79 = scmp.eq.s32.totalorder %s19, 1
      %p80 = por %p78, %p79
      %p82 = scmp.ne.s32.totalorder %s65, %s81
      %p83 = scmp.eq.s32.totalorder %s19, 0
      %p84 = por %p82, %p83
      %s86 = sadd.s32 %s85, 1
      %p89 = scmp.eq.s32.totalorder %s13, 1
      %p90 = scmp.ne.s32.totalorder %s85, %s87
      %p91 = scmp.eq.s32.totalorder %s13, 0
      %p92 = por %p90, %p91
      %p93 = scmp.ne.s32.totalorder %s85, %s87
      %p94 = scmp.eq.s32.totalorder %s18, 1
      %p95 = por %p93, %p94
      %p96 = scmp.ne.s32.totalorder %s87, %s88
      %p97 = scmp.eq.s32.totalorder %s18, 0
      %p98 = por %p96, %p97
      %p99 = scmp.ne.s32.totalorder %s87, %s88
      %p100 = scmp.eq.s32.totalorder %s19, 1
      %p101 = por %p99, %p100
      %p103 = scmp.ne.s32.totalorder %s88, %s102
      %p104 = scmp.eq.s32.totalorder %s19, 0
      %p105 = por %p103, %p104
      %s107 = sadd.s32 %s106, 1
      %p110 = scmp.eq.s32.totalorder %s13, 1
      %p111 = scmp.ne.s32.totalorder %s106, %s108
      %p112 = scmp.eq.s32.totalorder %s13, 0
      %p113 = por %p111, %p112
      %p114 = scmp.ne.s32.totalorder %s106, %s108
      %p115 = scmp.eq.s32.totalorder %s18, 1
      %p116 = por %p114, %p115
      %p117 = scmp.ne.s32.totalorder %s108, %s109
      %p118 = scmp.eq.s32.totalorder %s18, 0
      %p119 = por %p117, %p118
      %p120 = scmp.ne.s32.totalorder %s108, %s109
      %p121 = scmp.eq.s32.totalorder %s19, 1
      %p122 = por %p120, %p121
      %p124 = scmp.ne.s32.totalorder %s109, %s123
      %p125 = scmp.eq.s32.totalorder %s19, 0
      %p126 = por %p124, %p125
      %s128 = sadd.s32 %s127, 1
      %p131 = scmp.eq.s32.totalorder %s13, 1
      %p132 = scmp.ne.s32.totalorder %s127, %s129
      %p133 = scmp.eq.s32.totalorder %s13, 0
      %p134 = por %p132, %p133
      %p135 = scmp.ne.s32.totalorder %s127, %s129
      %p136 = scmp.eq.s32.totalorder %s18, 1
      %p137 = por %p135, %p136
      %p138 = scmp.ne.s32.totalorder %s129, %s130
      %p139 = scmp.eq.s32.totalorder %s18, 0
      %p140 = por %p138, %p139
      %p141 = scmp.ne.s32.totalorder %s129, %s130
      %p142 = scmp.eq.s32.totalorder %s19, 1
      %p143 = por %p141, %p142
      %p145 = scmp.ne.s32.totalorder %s130, %s144
      %p146 = scmp.eq.s32.totalorder %s19, 0
      %p147 = por %p145, %p146
      %s149 = sadd.s32 %s148, 1
      %p152 = scmp.eq.s32.totalorder %s13, 1
      %p153 = scmp.ne.s32.totalorder %s148, %s150
      %p154 = scmp.eq.s32.totalorder %s13, 0
      %p155 = por %p153, %p154
      %p156 = scmp.ne.s32.totalorder %s148, %s150
      %p157 = scmp.eq.s32.totalorder %s18, 1
      %p158 = por %p156, %p157
      %p159 = scmp.ne.s32.totalorder %s150, %s151
      %p160 = scmp.eq.s32.totalorder %s18, 0
      %p161 = por %p159, %p160
      %p162 = scmp.ne.s32.totalorder %s150, %s151
      %p163 = scmp.eq.s32.totalorder %s19, 1
      %p164 = por %p162, %p163
      %p166 = scmp.ne.s32.totalorder %s151, %s165
      %p167 = scmp.eq.s32.totalorder %s19, 0
      %p168 = por %p166, %p167
      %s169 = ssub.s32 %s20, %s32
      %p170 = scmp.eq.s32.totalorder %s169, 0
      %s172 = sadd.s32 %s171, 1
      %s173 = scalar_select %p170, %s171, %s172
      %p176 = pneg %p170
      %p177 = scmp.eq.s32.totalorder %s13, 1
      %p178 = por %p176, %p177
      %p179 = scmp.ne.s32.totalorder %s171, %s174
      %p180 = scmp.eq.s32.totalorder %s13, 0
      %p181 = por %p179, %p180
      %p182 = scmp.ne.s32.totalorder %s171, %s174
      %p183 = scmp.eq.s32.totalorder %s18, 1
      %p184 = por %p182, %p183
      %p185 = scmp.ne.s32.totalorder %s174, %s175
      %p186 = scmp.eq.s32.totalorder %s18, 0
      %p187 = por %p185, %p186
      %p188 = scmp.ne.s32.totalorder %s174, %s175
      %p189 = scmp.eq.s32.totalorder %s19, 1
      %p190 = por %p188, %p189
      %p192 = scmp.ne.s32.totalorder %s175, %s191
      %p193 = scmp.eq.s32.totalorder %s19, 0
      %p194 = por %p192, %p193
      %p195 = scmp.le.s32.totalorder 1, %s13
      %p196 = scmp.lt.s32.totalorder %s13, 3
      %p197 = pnand %p195, %p196
      %p198 = pneg %p197
      // Predicated region
      $region9: #{base_model_forward.1} parent=5 // pred_check
        _
      $region10: #{base_model_forward.1} parent=5 // pred_check_branch
        %200 = sbr.rel (%p197) target = $region12
      $region11: #{base_model_forward.1} parent=5 // pred_region
        %s201 = ssub.s32 %s13, 1
        // Predicated region
        $region13: #{base_model_forward.1} parent=11 // pred_check
          %p202 = pneg %p51
        $region14: #{base_model_forward.1} parent=11 // pred_check_branch
          %204 = sbr.rel (%p202) target = $region16
        $region15: #{base_model_forward.1} parent=11 // pred_region
          %s205 = smul.u32 2, %s22
          %p206 = scmp.lt.s32.totalorder %s205, 1
          %s207 = scalar_select %p206, %s205, 1
          %s208 = smul.addr %s207, 42
          %s209 = smul.addr %s208, 8
          %s210 = scalar_lea.vmem %s0, %s209
          %s211 = smul.u32 2, %s22
        $region16: #{base_model_forward.1} parent=11 // pred_fallthru
          _
        // Predicated region
        $region17: #{base_model_forward.1} parent=11 // pred_check
          %p212 = pneg %p98
        $region18: #{base_model_forward.1} parent=11 // pred_check_branch
          %214 = sbr.rel (%p212) target = $region20
        $region19: #{base_model_forward.1} parent=11 // pred_region
          _
        $region20: #{base_model_forward.1} parent=11 // pred_fallthru
          _
        // Predicated region
        $region21: #{base_model_forward.1} parent=11 // pred_check
          %p215 = pneg %p119
        $region22: #{base_model_forward.1} parent=11 // pred_check_branch
          %217 = sbr.rel (%p215) target = $region24
        $region23: #{base_model_forward.1} parent=11 // pred_region
          _
        $region24: #{base_model_forward.1} parent=11 // pred_fallthru
          _
        // Predicated region
        $region25: #{base_model_forward.1} parent=11 // pred_check
          %p218 = pneg %p140
        $region26: #{base_model_forward.1} parent=11 // pred_check_branch
          %220 = sbr.rel (%p218) target = $region28
        $region27: #{base_model_forward.1} parent=11 // pred_region
          _
        $region28: #{base_model_forward.1} parent=11 // pred_fallthru
          _
        // Predicated region
        $region29: #{base_model_forward.1} parent=11 // pred_check
          %p221 = pneg %p161
        $region30: #{base_model_forward.1} parent=11 // pred_check_branch
          %223 = sbr.rel (%p221) target = $region32
        $region31: #{base_model_forward.1} parent=11 // pred_region
          _
        $region32: #{base_model_forward.1} parent=11 // pred_fallthru
          _
      $region12: #{base_model_forward.1} parent=5 // pred_fallthru
        _
      %p224 = scmp.lt.s32.totalorder %s13, 2
      // Predicated region
      $region33: #{base_model_forward.1} parent=5 // pred_check
        %p225 = pneg %p224
      $region34: #{base_model_forward.1} parent=5 // pred_check_branch
        %227 = sbr.rel (%p225) target = $region36
      $region35: #{base_model_forward.1} parent=5 // pred_region
        // Predicated region
        $region37: #{base_model_forward.1} parent=35 // pred_check
          %p228 = pneg %p71
        $region38: #{base_model_forward.1} parent=35 // pred_check_branch
          %230 = sbr.rel (%p228) target = $region40
        $region39: #{base_model_forward.1} parent=35 // pred_region
          %p231 = scmp.lt.s32.totalorder %s21, 1
          %s232 = scalar_select %p231, %s21, 1
          %s233 = smul.addr %s232, 18
          %s234 = smul.addr %s233, 8
          %s235 = scalar_lea.vmem %s1, %s234
        $region40: #{base_model_forward.1} parent=35 // pred_fallthru
          _
      $region36: #{base_model_forward.1} parent=5 // pred_fallthru
        _
      %p236 = scmp.le.s32.totalorder 1, %s13
      %p237 = scmp.lt.s32.totalorder %s13, 3
      %p238 = pnand %p236, %p237
      %p239 = pneg %p238
      // Predicated region
      $region41: #{base_model_forward.1} parent=5 // pred_check
        _
      $region42: #{base_model_forward.1} parent=5 // pred_check_branch
        %241 = sbr.rel (%p238) target = $region44
      $region43: #{base_model_forward.1} parent=5 // pred_region
        %s242 = ssub.s32 %s13, 1
        %s243 = smul.u32 2, %s22
        %p244 = scmp.lt.s32.totalorder %s243, 1
        %s245 = scalar_select %p244, %s243, 1
        %s246 = smul.addr %s245, 42
        %s247 = smul.addr %s246, 8
        %s248 = scalar_lea.vmem %s0, %s247
        %p249 = pneg %p51
        %p250 = pneg %p48
        %p251 = scmp.lt.s32.totalorder %s23, 1
        %s252 = scalar_select %p251, %s23, 1
        %s253 = smul.addr %s252, 18
        %s254 = smul.addr %s253, 8
        %s255 = scalar_lea.vmem %s1, %s254
        %p256 = pneg %p77
        %p257 = pneg %p74
        %p258 = pneg %p98
        %p259 = pneg %p95
        %p260 = pneg %p119
        %p261 = pneg %p116
        %p262 = pneg %p140
        %p263 = pneg %p137
        %p264 = pneg %p161
        %p265 = pneg %p158
        %p266 = pneg %p187
        %p267 = pneg %p184
        %s268 = smul.u32 2, %s22
        %p269 = scmp.lt.s32.totalorder %s268, 1
        %s270 = scalar_select %p269, %s268, 1
        %s271 = smul.addr %s270, 42
        %s272 = smul.addr %s271, 8
        %s273 = scalar_lea.vmem %s0, %s272
        %s274 = smul.u32 2, %s22
        %p275 = scmp.lt.s32.totalorder %s23, 1
        %s276 = scalar_select %p275, %s23, 1
        %s277 = smul.addr %s276, 18
        %s278 = smul.addr %s277, 8
        %s279 = scalar_lea.vmem %s1, %s278
        %p281 = scmp.eq.s32.totalorder %s23, 0
        // Predicated region
        $region45: #{base_model_forward.1} parent=43 // pred_check
          %p282 = pneg %p281
        $region46: #{base_model_forward.1} parent=43 // pred_check_branch
          %284 = sbr.rel (%p282) target = $region48
        $region47: #{base_model_forward.1} parent=43 // pred_region
          %285 = vst [vmem:[#allocation2] sm:$0x3] 0.0
        $region48: #{base_model_forward.1} parent=43 // pred_fallthru
          _
        %s286 = smul.u32 %s23, 144
        %s287 = sadd.s32 %s286, 24
        %s288 = sadd.s32 %s286, 5
        %s289 = scalar_lea.vmem %s273, %s288
        %v290 = vld [vmem:[%s289] sm:$0xff]
        %v291 = vld [vmem:[%s289 + $0x8] sm:$0xff]
        %v292 = vld [vmem:[%s289 + $0x10] sm:$0xff]
        %v293 = vld [vmem:[%s289 + $0x18] sm:$0xff]
        %v294 = vld [vmem:[%s289 + $0x20] sm:$0xff]
        %v295 = vld [vmem:[%s289 + $0x28] sm:$0xff]
        %v296 = vld [vmem:[%s289 + $0x30] sm:$0xff]
        %v297 = vld [vmem:[%s289 + $0x38] sm:$0xff]
        %v298 = vld [vmem:[%s289 + $0x40] sm:$0xff]
        %v299 = vld [vmem:[%s289 + $0x48] sm:$0xff]
        %v300 = vld [vmem:[%s289 + $0x50] sm:$0xff]
        %v301 = vld [vmem:[%s289 + $0x58] sm:$0xff]
        %v302 = vld [vmem:[%s289 + $0x60] sm:$0xff]
        %v303 = vld [vmem:[%s289 + $0x68] sm:$0xff]
        %v304 = vld [vmem:[%s289 + $0x70] sm:$0xff]
        %v305 = vld [vmem:[%s289 + $0x78] sm:$0xff]
        %v306 = vld [vmem:[%s289 + $0x80] sm:$0xff]
        %v307 = vld [vmem:[%s289 + $0x88] sm:$0xff]
        %v308 = vld [vmem:[%s289 + $0x150] sm:$0xff]
        %v309 = vld [vmem:[%s289 + $0x158] sm:$0xff]
        %v310 = vld [vmem:[%s289 + $0x160] sm:$0xff]
        %v311 = vld [vmem:[%s289 + $0x168] sm:$0xff]
        %v312 = vld [vmem:[%s289 + $0x170] sm:$0xff]
        %v313 = vld [vmem:[%s289 + $0x178] sm:$0xff]
        %v314 = vld [vmem:[%s289 + $0x180] sm:$0xff]
        %v315 = vld [vmem:[%s289 + $0x188] sm:$0xff]
        %v316 = vld [vmem:[%s289 + $0x190] sm:$0xff]
        %v317 = vld [vmem:[%s289 + $0x198] sm:$0xff]
        %v318 = vld [vmem:[%s289 + $0x1a0] sm:$0xff]
        %v319 = vld [vmem:[%s289 + $0x1a8] sm:$0xff]
        %v320 = vld [vmem:[%s289 + $0x1b0] sm:$0xff]
        %v321 = vld [vmem:[%s289 + $0x1b8] sm:$0xff]
        %v322 = vld [vmem:[%s289 + $0x1c0] sm:$0xff]
        %v323 = vld [vmem:[%s289 + $0x1c8] sm:$0xff]
        %v324 = vld [vmem:[%s289 + $0x1d0] sm:$0xff]
        %v325 = vld [vmem:[%s289 + $0x1d8] sm:$0xff]
        %s326 = sadd.s32 %s286, 6
        %s327 = scalar_lea.vmem %s273, %s326
        %v328 = vld [vmem:[%s327] sm:$0xff]
        %v329 = vld [vmem:[%s327 + $0x8] sm:$0xff]
        %v330 = vld [vmem:[%s327 + $0x10] sm:$0xff]
        %v331 = vld [vmem:[%s327 + $0x18] sm:$0xff]
        %v332 = vld [vmem:[%s327 + $0x20] sm:$0xff]
        %v333 = vld [vmem:[%s327 + $0x28] sm:$0xff]
        %v334 = vld [vmem:[%s327 + $0x30] sm:$0xff]
        %v335 = vld [vmem:[%s327 + $0x38] sm:$0xff]
        %v336 = vld [vmem:[%s327 + $0x40] sm:$0xff]
        %v337 = vld [vmem:[%s327 + $0x48] sm:$0xff]
        %v338 = vld [vmem:[%s327 + $0x50] sm:$0xff]
        %v339 = vld [vmem:[%s327 + $0x58] sm:$0xff]
        %v340 = vld [vmem:[%s327 + $0x60] sm:$0xff]
        %v341 = vld [vmem:[%s327 + $0x68] sm:$0xff]
        %v342 = vld [vmem:[%s327 + $0x70] sm:$0xff]
        %v343 = vld [vmem:[%s327 + $0x78] sm:$0xff]
        %v344 = vld [vmem:[%s327 + $0x80] sm:$0xff]
        %v345 = vld [vmem:[%s327 + $0x88] sm:$0xff]
        %v346 = vld [vmem:[%s327 + $0x150] sm:$0xff]
        %v347 = vld [vmem:[%s327 + $0x158] sm:$0xff]
        %v348 = vld [vmem:[%s327 + $0x160] sm:$0xff]
        %v349 = vld [vmem:[%s327 + $0x168] sm:$0xff]
        %v350 = vld [vmem:[%s327 + $0x170] sm:$0xff]
        %v351 = vld [vmem:[%s327 + $0x178] sm:$0xff]
        %v352 = vld [vmem:[%s327 + $0x180] sm:$0xff]
        %v353 = vld [vmem:[%s327 + $0x188] sm:$0xff]
        %v354 = vld [vmem:[%s327 + $0x190] sm:$0xff]
        %v355 = vld [vmem:[%s327 + $0x198] sm:$0xff]
        %v356 = vld [vmem:[%s327 + $0x1a0] sm:$0xff]
        %v357 = vld [vmem:[%s327 + $0x1a8] sm:$0xff]
        %v358 = vld [vmem:[%s327 + $0x1b0] sm:$0xff]
        %v359 = vld [vmem:[%s327 + $0x1b8] sm:$0xff]
        %v360 = vld [vmem:[%s327 + $0x1c0] sm:$0xff]
        %v361 = vld [vmem:[%s327 + $0x1c8] sm:$0xff]
        %v362 = vld [vmem:[%s327 + $0x1d0] sm:$0xff]
        %v363 = vld [vmem:[%s327 + $0x1d8] sm:$0xff]
        %s364 = sadd.s32 %s286, 7
        %s365 = scalar_lea.vmem %s273, %s364
        %v366 = vld [vmem:[%s365] sm:$0xff]
        %v367 = vld [vmem:[%s365 + $0x8] sm:$0xff]
        %v368 = vld [vmem:[%s365 + $0x10] sm:$0xff]
        %v369 = vld [vmem:[%s365 + $0x18] sm:$0xff]
        %v370 = vld [vmem:[%s365 + $0x20] sm:$0xff]
        %v371 = vld [vmem:[%s365 + $0x28] sm:$0xff]
        %v372 = vld [vmem:[%s365 + $0x30] sm:$0xff]
        %v373 = vld [vmem:[%s365 + $0x38] sm:$0xff]
        %v374 = vld [vmem:[%s365 + $0x40] sm:$0xff]
        %v375 = vld [vmem:[%s365 + $0x48] sm:$0xff]
        %v376 = vld [vmem:[%s365 + $0x50] sm:$0xff]
        %v377 = vld [vmem:[%s365 + $0x58] sm:$0xff]
        %v378 = vld [vmem:[%s365 + $0x60] sm:$0xff]
        %v379 = vld [vmem:[%s365 + $0x68] sm:$0xff]
        %v380 = vld [vmem:[%s365 + $0x70] sm:$0xff]
        %v381 = vld [vmem:[%s365 + $0x78] sm:$0xff]
        %v382 = vld [vmem:[%s365 + $0x80] sm:$0xff]
        %v383 = vld [vmem:[%s365 + $0x88] sm:$0xff]
        %v384 = vld [vmem:[%s365 + $0x150] sm:$0xff]
        %v385 = vld [vmem:[%s365 + $0x158] sm:$0xff]
        %v386 = vld [vmem:[%s365 + $0x160] sm:$0xff]
        %v387 = vld [vmem:[%s365 + $0x168] sm:$0xff]
        %v388 = vld [vmem:[%s365 + $0x170] sm:$0xff]
        %v389 = vld [vmem:[%s365 + $0x178] sm:$0xff]
        %v390 = vld [vmem:[%s365 + $0x180] sm:$0xff]
        %v391 = vld [vmem:[%s365 + $0x188] sm:$0xff]
        %v392 = vld [vmem:[%s365 + $0x190] sm:$0xff]
        %v393 = vld [vmem:[%s365 + $0x198] sm:$0xff]
        %v394 = vld [vmem:[%s365 + $0x1a0] sm:$0xff]
        %v395 = vld [vmem:[%s365 + $0x1a8] sm:$0xff]
        %v396 = vld [vmem:[%s365 + $0x1b0] sm:$0xff]
        %v397 = vld [vmem:[%s365 + $0x1b8] sm:$0xff]
        %v398 = vld [vmem:[%s365 + $0x1c0] sm:$0xff]
        %v399 = vld [vmem:[%s365 + $0x1c8] sm:$0xff]
        %v400 = vld [vmem:[%s365 + $0x1d0] sm:$0xff]
        %v401 = vld [vmem:[%s365 + $0x1d8] sm:$0xff]
        %s402 = sadd.s32 %s286, 23
        %s403 = scalar_lea.vmem %s273, %s402
        %v404 = vld [vmem:[%s403] sm:$0xff]
        %v405 = vld [vmem:[%s403 + $0x8] sm:$0xff]
        %v406 = vld [vmem:[%s403 + $0x10] sm:$0xff]
        %v407 = vld [vmem:[%s403 + $0x18] sm:$0xff]
        %v408 = vld [vmem:[%s403 + $0x20] sm:$0xff]
        %v409 = vld [vmem:[%s403 + $0x28] sm:$0xff]
        %v410 = vld [vmem:[%s403 + $0x30] sm:$0xff]
        %v411 = vld [vmem:[%s403 + $0x38] sm:$0xff]
        %v412 = vld [vmem:[%s403 + $0x40] sm:$0xff]
        %v413 = vld [vmem:[%s403 + $0x48] sm:$0xff]
        %v414 = vld [vmem:[%s403 + $0x50] sm:$0xff]
        %v415 = vld [vmem:[%s403 + $0x58] sm:$0xff]
        %v416 = vld [vmem:[%s403 + $0x60] sm:$0xff]
        %v417 = vld [vmem:[%s403 + $0x68] sm:$0xff]
        %v418 = vld [vmem:[%s403 + $0x70] sm:$0xff]
        %v419 = vld [vmem:[%s403 + $0x78] sm:$0xff]
        %v420 = vld [vmem:[%s403 + $0x80] sm:$0xff]
        %v421 = vld [vmem:[%s403 + $0x88] sm:$0xff]
        %v422 = vld [vmem:[%s403 + $0x150] sm:$0xff]
        %v423 = vld [vmem:[%s403 + $0x158] sm:$0xff]
        %v424 = vld [vmem:[%s403 + $0x160] sm:$0xff]
        %v425 = vld [vmem:[%s403 + $0x168] sm:$0xff]
        %v426 = vld [vmem:[%s403 + $0x170] sm:$0xff]
        %v427 = vld [vmem:[%s403 + $0x178] sm:$0xff]
        %v428 = vld [vmem:[%s403 + $0x180] sm:$0xff]
        %v429 = vld [vmem:[%s403 + $0x188] sm:$0xff]
        %v430 = vld [vmem:[%s403 + $0x190] sm:$0xff]
        %v431 = vld [vmem:[%s403 + $0x198] sm:$0xff]
        %v432 = vld [vmem:[%s403 + $0x1a0] sm:$0xff]
        %v433 = vld [vmem:[%s403 + $0x1a8] sm:$0xff]
        %v434 = vld [vmem:[%s403 + $0x1b0] sm:$0xff]
        %v435 = vld [vmem:[%s403 + $0x1b8] sm:$0xff]
        %v436 = vld [vmem:[%s403 + $0x1c0] sm:$0xff]
        %v437 = vld [vmem:[%s403 + $0x1c8] sm:$0xff]
        %v438 = vld [vmem:[%s403 + $0x1d0] sm:$0xff]
        %v439 = vld [vmem:[%s403 + $0x1d8] sm:$0xff]
        %s440 = scalar_lea.vmem %s273, %s287
        %v441 = vld [vmem:[%s440] sm:$0xff]
        %v442 = vld [vmem:[%s440 + $0x8] sm:$0xff]
        %v443 = vld [vmem:[%s440 + $0x10] sm:$0xff]
        %v444 = vld [vmem:[%s440 + $0x18] sm:$0xff]
        %v445 = vld [vmem:[%s440 + $0x20] sm:$0xff]
        %v446 = vld [vmem:[%s440 + $0x28] sm:$0xff]
        %v447 = vld [vmem:[%s440 + $0x30] sm:$0xff]
        %v448 = vld [vmem:[%s440 + $0x38] sm:$0xff]
        %v449 = vld [vmem:[%s440 + $0x40] sm:$0xff]
        %v450 = vld [vmem:[%s440 + $0x48] sm:$0xff]
        %v451 = vld [vmem:[%s440 + $0x50] sm:$0xff]
        %v452 = vld [vmem:[%s440 + $0x58] sm:$0xff]
        %v453 = vld [vmem:[%s440 + $0x60] sm:$0xff]
        %v454 = vld [vmem:[%s440 + $0x68] sm:$0xff]
        %v455 = vld [vmem:[%s440 + $0x70] sm:$0xff]
        %v456 = vld [vmem:[%s440 + $0x78] sm:$0xff]
        %v457 = vld [vmem:[%s440 + $0x80] sm:$0xff]
        %v458 = vld [vmem:[%s440 + $0x88] sm:$0xff]
        %v459 = vld [vmem:[%s440 + $0x150] sm:$0xff]
        %v460 = vld [vmem:[%s440 + $0x158] sm:$0xff]
        %v461 = vld [vmem:[%s440 + $0x160] sm:$0xff]
        %v462 = vld [vmem:[%s440 + $0x168] sm:$0xff]
        %v463 = vld [vmem:[%s440 + $0x170] sm:$0xff]
        %v464 = vld [vmem:[%s440 + $0x178] sm:$0xff]
        %v465 = vld [vmem:[%s440 + $0x180] sm:$0xff]
        %v466 = vld [vmem:[%s440 + $0x188] sm:$0xff]
        %v467 = vld [vmem:[%s440 + $0x190] sm:$0xff]
        %v468 = vld [vmem:[%s440 + $0x198] sm:$0xff]
        %v469 = vld [vmem:[%s440 + $0x1a0] sm:$0xff]
        %v470 = vld [vmem:[%s440 + $0x1a8] sm:$0xff]
        %v471 = vld [vmem:[%s440 + $0x1b0] sm:$0xff]
        %v472 = vld [vmem:[%s440 + $0x1b8] sm:$0xff]
        %v473 = vld [vmem:[%s440 + $0x1c0] sm:$0xff]
        %v474 = vld [vmem:[%s440 + $0x1c8] sm:$0xff]
        %v475 = vld [vmem:[%s440 + $0x1d0] sm:$0xff]
        %v476 = vld [vmem:[%s440 + $0x1d8] sm:$0xff]
        %s477 = sadd.s32 %s286, 25
        %s478 = scalar_lea.vmem %s273, %s477
        %v479 = vld [vmem:[%s478] sm:$0xff]
        %v480 = vld [vmem:[%s478 + $0x8] sm:$0xff]
        %v481 = vld [vmem:[%s478 + $0x10] sm:$0xff]
        %v482 = vld [vmem:[%s478 + $0x18] sm:$0xff]
        %v483 = vld [vmem:[%s478 + $0x20] sm:$0xff]
        %v484 = vld [vmem:[%s478 + $0x28] sm:$0xff]
        %v485 = vld [vmem:[%s478 + $0x30] sm:$0xff]
        %v486 = vld [vmem:[%s478 + $0x38] sm:$0xff]
        %v487 = vld [vmem:[%s478 + $0x40] sm:$0xff]
        %v488 = vld [vmem:[%s478 + $0x48] sm:$0xff]
        %v489 = vld [vmem:[%s478 + $0x50] sm:$0xff]
        %v490 = vld [vmem:[%s478 + $0x58] sm:$0xff]
        %v491 = vld [vmem:[%s478 + $0x60] sm:$0xff]
        %v492 = vld [vmem:[%s478 + $0x68] sm:$0xff]
        %v493 = vld [vmem:[%s478 + $0x70] sm:$0xff]
        %v494 = vld [vmem:[%s478 + $0x78] sm:$0xff]
        %v495 = vld [vmem:[%s478 + $0x80] sm:$0xff]
        %v496 = vld [vmem:[%s478 + $0x88] sm:$0xff]
        %v497 = vld [vmem:[%s478 + $0x150] sm:$0xff]
        %v498 = vld [vmem:[%s478 + $0x158] sm:$0xff]
        %v499 = vld [vmem:[%s478 + $0x160] sm:$0xff]
        %v500 = vld [vmem:[%s478 + $0x168] sm:$0xff]
        %v501 = vld [vmem:[%s478 + $0x170] sm:$0xff]
        %v502 = vld [vmem:[%s478 + $0x178] sm:$0xff]
        %v503 = vld [vmem:[%s478 + $0x180] sm:$0xff]
        %v504 = vld [vmem:[%s478 + $0x188] sm:$0xff]
        %v505 = vld [vmem:[%s478 + $0x190] sm:$0xff]
        %v506 = vld [vmem:[%s478 + $0x198] sm:$0xff]
        %v507 = vld [vmem:[%s478 + $0x1a0] sm:$0xff]
        %v508 = vld [vmem:[%s478 + $0x1a8] sm:$0xff]
        %v509 = vld [vmem:[%s478 + $0x1b0] sm:$0xff]
        %v510 = vld [vmem:[%s478 + $0x1b8] sm:$0xff]
        %v511 = vld [vmem:[%s478 + $0x1c0] sm:$0xff]
        %v512 = vld [vmem:[%s478 + $0x1c8] sm:$0xff]
        %v513 = vld [vmem:[%s478 + $0x1d0] sm:$0xff]
        %v514 = vld [vmem:[%s478 + $0x1d8] sm:$0xff]
        %s515 = sadd.s32 %s286, 41
        %s516 = scalar_lea.vmem %s273, %s515
        %v517 = vld [vmem:[%s516] sm:$0xff]
        %v518 = vld [vmem:[%s516 + $0x8] sm:$0xff]
        %v519 = vld [vmem:[%s516 + $0x10] sm:$0xff]
        %v520 = vld [vmem:[%s516 + $0x18] sm:$0xff]
        %v521 = vld [vmem:[%s516 + $0x20] sm:$0xff]
        %v522 = vld [vmem:[%s516 + $0x28] sm:$0xff]
        %v523 = vld [vmem:[%s516 + $0x30] sm:$0xff]
        %v524 = vld [vmem:[%s516 + $0x38] sm:$0xff]
        %v525 = vld [vmem:[%s516 + $0x40] sm:$0xff]
        %v526 = vld [vmem:[%s516 + $0x48] sm:$0xff]
        %v527 = vld [vmem:[%s516 + $0x50] sm:$0xff]
        %v528 = vld [vmem:[%s516 + $0x58] sm:$0xff]
        %v529 = vld [vmem:[%s516 + $0x60] sm:$0xff]
        %v530 = vld [vmem:[%s516 + $0x68] sm:$0xff]
        %v531 = vld [vmem:[%s516 + $0x70] sm:$0xff]
        %v532 = vld [vmem:[%s516 + $0x78] sm:$0xff]
        %v533 = vld [vmem:[%s516 + $0x80] sm:$0xff]
        %v534 = vld [vmem:[%s516 + $0x88] sm:$0xff]
        %v535 = vld [vmem:[%s516 + $0x150] sm:$0xff]
        %v536 = vld [vmem:[%s516 + $0x158] sm:$0xff]
        %v537 = vld [vmem:[%s516 + $0x160] sm:$0xff]
        %v538 = vld [vmem:[%s516 + $0x168] sm:$0xff]
        %v539 = vld [vmem:[%s516 + $0x170] sm:$0xff]
        %v540 = vld [vmem:[%s516 + $0x178] sm:$0xff]
        %v541 = vld [vmem:[%s516 + $0x180] sm:$0xff]
        %v542 = vld [vmem:[%s516 + $0x188] sm:$0xff]
        %v543 = vld [vmem:[%s516 + $0x190] sm:$0xff]
        %v544 = vld [vmem:[%s516 + $0x198] sm:$0xff]
        %v545 = vld [vmem:[%s516 + $0x1a0] sm:$0xff]
        %v546 = vld [vmem:[%s516 + $0x1a8] sm:$0xff]
        %v547 = vld [vmem:[%s516 + $0x1b0] sm:$0xff]
        %v548 = vld [vmem:[%s516 + $0x1b8] sm:$0xff]
        %v549 = vld [vmem:[%s516 + $0x1c0] sm:$0xff]
        %v550 = vld [vmem:[%s516 + $0x1c8] sm:$0xff]
        %v551 = vld [vmem:[%s516 + $0x1d0] sm:$0xff]
        %v552 = vld [vmem:[%s516 + $0x1d8] sm:$0xff]
        %s553 = sadd.s32 %s286, 42
        %s554 = scalar_lea.vmem %s273, %s553
        %v555 = vld [vmem:[%s554] sm:$0xff]
        %v556 = vld [vmem:[%s554 + $0x8] sm:$0xff]
        %v557 = vld [vmem:[%s554 + $0x10] sm:$0xff]
        %v558 = vld [vmem:[%s554 + $0x18] sm:$0xff]
        %v559 = vld [vmem:[%s554 + $0x20] sm:$0xff]
        %v560 = vld [vmem:[%s554 + $0x28] sm:$0xff]
        %v561 = vld [vmem:[%s554 + $0x30] sm:$0xff]
        %v562 = vld [vmem:[%s554 + $0x38] sm:$0xff]
        %v563 = vld [vmem:[%s554 + $0x40] sm:$0xff]
        %v564 = vld [vmem:[%s554 + $0x48] sm:$0xff]
        %v565 = vld [vmem:[%s554 + $0x50] sm:$0xff]
        %v566 = vld [vmem:[%s554 + $0x58] sm:$0xff]
        %v567 = vld [vmem:[%s554 + $0x60] sm:$0xff]
        %v568 = vld [vmem:[%s554 + $0x68] sm:$0xff]
        %v569 = vld [vmem:[%s554 + $0x70] sm:$0xff]
        %v570 = vld [vmem:[%s554 + $0x78] sm:$0xff]
        %v571 = vld [vmem:[%s554 + $0x80] sm:$0xff]
        %v572 = vld [vmem:[%s554 + $0x88] sm:$0xff]
        %v573 = vld [vmem:[%s554 + $0x150] sm:$0xff]
        %v574 = vld [vmem:[%s554 + $0x158] sm:$0xff]
        %v575 = vld [vmem:[%s554 + $0x160] sm:$0xff]
        %v576 = vld [vmem:[%s554 + $0x168] sm:$0xff]
        %v577 = vld [vmem:[%s554 + $0x170] sm:$0xff]
        %v578 = vld [vmem:[%s554 + $0x178] sm:$0xff]
        %v579 = vld [vmem:[%s554 + $0x180] sm:$0xff]
        %v580 = vld [vmem:[%s554 + $0x188] sm:$0xff]
        %v581 = vld [vmem:[%s554 + $0x190] sm:$0xff]
        %v582 = vld [vmem:[%s554 + $0x198] sm:$0xff]
        %v583 = vld [vmem:[%s554 + $0x1a0] sm:$0xff]
        %v584 = vld [vmem:[%s554 + $0x1a8] sm:$0xff]
        %v585 = vld [vmem:[%s554 + $0x1b0] sm:$0xff]
        %v586 = vld [vmem:[%s554 + $0x1b8] sm:$0xff]
        %v587 = vld [vmem:[%s554 + $0x1c0] sm:$0xff]
        %v588 = vld [vmem:[%s554 + $0x1c8] sm:$0xff]
        %v589 = vld [vmem:[%s554 + $0x1d0] sm:$0xff]
        %v590 = vld [vmem:[%s554 + $0x1d8] sm:$0xff]
        %s591 = sadd.s32 %s286, 43
        %s592 = scalar_lea.vmem %s273, %s591
        %v593 = vld [vmem:[%s592] sm:$0xff]
        %v594 = vld [vmem:[%s592 + $0x8] sm:$0xff]
        %v595 = vld [vmem:[%s592 + $0x10] sm:$0xff]
        %v596 = vld [vmem:[%s592 + $0x18] sm:$0xff]
        %v597 = vld [vmem:[%s592 + $0x20] sm:$0xff]
        %v598 = vld [vmem:[%s592 + $0x28] sm:$0xff]
        %v599 = vld [vmem:[%s592 + $0x30] sm:$0xff]
        %v600 = vld [vmem:[%s592 + $0x38] sm:$0xff]
        %v601 = vld [vmem:[%s592 + $0x40] sm:$0xff]
        %v602 = vld [vmem:[%s592 + $0x48] sm:$0xff]
        %v603 = vld [vmem:[%s592 + $0x50] sm:$0xff]
        %v604 = vld [vmem:[%s592 + $0x58] sm:$0xff]
        %v605 = vld [vmem:[%s592 + $0x60] sm:$0xff]
        %v606 = vld [vmem:[%s592 + $0x68] sm:$0xff]
        %v607 = vld [vmem:[%s592 + $0x70] sm:$0xff]
        %v608 = vld [vmem:[%s592 + $0x78] sm:$0xff]
        %v609 = vld [vmem:[%s592 + $0x80] sm:$0xff]
        %v610 = vld [vmem:[%s592 + $0x88] sm:$0xff]
        %v611 = vld [vmem:[%s592 + $0x150] sm:$0xff]
        %v612 = vld [vmem:[%s592 + $0x158] sm:$0xff]
        %v613 = vld [vmem:[%s592 + $0x160] sm:$0xff]
        %v614 = vld [vmem:[%s592 + $0x168] sm:$0xff]
        %v615 = vld [vmem:[%s592 + $0x170] sm:$0xff]
        %v616 = vld [vmem:[%s592 + $0x178] sm:$0xff]
        %v617 = vld [vmem:[%s592 + $0x180] sm:$0xff]
        %v618 = vld [vmem:[%s592 + $0x188] sm:$0xff]
        %v619 = vld [vmem:[%s592 + $0x190] sm:$0xff]
        %v620 = vld [vmem:[%s592 + $0x198] sm:$0xff]
        %v621 = vld [vmem:[%s592 + $0x1a0] sm:$0xff]
        %v622 = vld [vmem:[%s592 + $0x1a8] sm:$0xff]
        %v623 = vld [vmem:[%s592 + $0x1b0] sm:$0xff]
        %v624 = vld [vmem:[%s592 + $0x1b8] sm:$0xff]
        %v625 = vld [vmem:[%s592 + $0x1c0] sm:$0xff]
        %v626 = vld [vmem:[%s592 + $0x1c8] sm:$0xff]
        %v627 = vld [vmem:[%s592 + $0x1d0] sm:$0xff]
        %v628 = vld [vmem:[%s592 + $0x1d8] sm:$0xff]
        %665 = vrot.lane.b32.xlu0 %v328, 4
        %v666 = vpop.permute.xlu0 %665
        %667 = vrot.lane.b32.xlu0 %v329, 4
        %v668 = vpop.permute.xlu0 %667
        %669 = vrot.lane.b32.xlu0 %v330, 4
        %v670 = vpop.permute.xlu0 %669
        %671 = vrot.lane.b32.xlu0 %v331, 4
        %v672 = vpop.permute.xlu0 %671
        %673 = vrot.lane.b32.xlu0 %v332, 4
        %v674 = vpop.permute.xlu0 %673
        %675 = vrot.lane.b32.xlu0 %v333, 4
        %v676 = vpop.permute.xlu0 %675
        %677 = vrot.lane.b32.xlu0 %v334, 4
        %v678 = vpop.permute.xlu0 %677
        %679 = vrot.lane.b32.xlu0 %v335, 4
        %v680 = vpop.permute.xlu0 %679
        %681 = vrot.lane.b32.xlu0 %v336, 4
        %v682 = vpop.permute.xlu0 %681
        %683 = vrot.lane.b32.xlu0 %v337, 4
        %v684 = vpop.permute.xlu0 %683
        %685 = vrot.lane.b32.xlu0 %v338, 4
        %v686 = vpop.permute.xlu0 %685
        %687 = vrot.lane.b32.xlu0 %v339, 4
        %v688 = vpop.permute.xlu0 %687
        %689 = vrot.lane.b32.xlu0 %v340, 4
        %v690 = vpop.permute.xlu0 %689
        %691 = vrot.lane.b32.xlu0 %v341, 4
        %v692 = vpop.permute.xlu0 %691
        %693 = vrot.lane.b32.xlu0 %v342, 4
        %v694 = vpop.permute.xlu0 %693
        %695 = vrot.lane.b32.xlu0 %v343, 4
        %v696 = vpop.permute.xlu0 %695
        %697 = vrot.lane.b32.xlu0 %v344, 4
        %v698 = vpop.permute.xlu0 %697
        %699 = vrot.lane.b32.xlu0 %v345, 4
        %v700 = vpop.permute.xlu0 %699
        %701 = vrot.lane.b32.xlu0 %v346, 4
        %v702 = vpop.permute.xlu0 %701
        %703 = vrot.lane.b32.xlu0 %v347, 4
        %v704 = vpop.permute.xlu0 %703
        %705 = vrot.lane.b32.xlu0 %v348, 4
        %v706 = vpop.permute.xlu0 %705
        %707 = vrot.lane.b32.xlu0 %v349, 4
        %v708 = vpop.permute.xlu0 %707
        %709 = vrot.lane.b32.xlu0 %v350, 4
        %v710 = vpop.permute.xlu0 %709
        %711 = vrot.lane.b32.xlu0 %v351, 4
        %v712 = vpop.permute.xlu0 %711
        %713 = vrot.lane.b32.xlu0 %v352, 4
        %v714 = vpop.permute.xlu0 %713
        %715 = vrot.lane.b32.xlu0 %v353, 4
        %v716 = vpop.permute.xlu0 %715
        %717 = vrot.lane.b32.xlu0 %v354, 4
        %v718 = vpop.permute.xlu0 %717
        %719 = vrot.lane.b32.xlu0 %v355, 4
        %v720 = vpop.permute.xlu0 %719
        %721 = vrot.lane.b32.xlu0 %v356, 4
        %v722 = vpop.permute.xlu0 %721
        %723 = vrot.lane.b32.xlu0 %v357, 4
        %v724 = vpop.permute.xlu0 %723
        %725 = vrot.lane.b32.xlu0 %v358, 4
        %v726 = vpop.permute.xlu0 %725
        %727 = vrot.lane.b32.xlu0 %v359, 4
        %v728 = vpop.permute.xlu0 %727
        %729 = vrot.lane.b32.xlu0 %v360, 4
        %v730 = vpop.permute.xlu0 %729
        %731 = vrot.lane.b32.xlu0 %v361, 4
        %v732 = vpop.permute.xlu0 %731
        %733 = vrot.lane.b32.xlu0 %v362, 4
        %v734 = vpop.permute.xlu0 %733
        %735 = vrot.lane.b32.xlu0 %v363, 4
        %v736 = vpop.permute.xlu0 %735
        %809 = vrot.lane.b32.xlu0 %v366, 8
        %v810 = vpop.permute.xlu0 %809
        %811 = vrot.lane.b32.xlu0 %v367, 8
        %v812 = vpop.permute.xlu0 %811
        %813 = vrot.lane.b32.xlu0 %v368, 8
        %v814 = vpop.permute.xlu0 %813
        %815 = vrot.lane.b32.xlu0 %v369, 8
        %v816 = vpop.permute.xlu0 %815
        %817 = vrot.lane.b32.xlu0 %v370, 8
        %v818 = vpop.permute.xlu0 %817
        %819 = vrot.lane.b32.xlu0 %v371, 8
        %v820 = vpop.permute.xlu0 %819
        %821 = vrot.lane.b32.xlu0 %v372, 8
        %v822 = vpop.permute.xlu0 %821
        %823 = vrot.lane.b32.xlu0 %v373, 8
        %v824 = vpop.permute.xlu0 %823
        %825 = vrot.lane.b32.xlu0 %v374, 8
        %v826 = vpop.permute.xlu0 %825
        %827 = vrot.lane.b32.xlu0 %v375, 8
        %v828 = vpop.permute.xlu0 %827
        %829 = vrot.lane.b32.xlu0 %v376, 8
        %v830 = vpop.permute.xlu0 %829
        %831 = vrot.lane.b32.xlu0 %v377, 8
        %v832 = vpop.permute.xlu0 %831
        %833 = vrot.lane.b32.xlu0 %v378, 8
        %v834 = vpop.permute.xlu0 %833
        %835 = vrot.lane.b32.xlu0 %v379, 8
        %v836 = vpop.permute.xlu0 %835
        %837 = vrot.lane.b32.xlu0 %v380, 8
        %v838 = vpop.permute.xlu0 %837
        %839 = vrot.lane.b32.xlu0 %v381, 8
        %v840 = vpop.permute.xlu0 %839
        %841 = vrot.lane.b32.xlu0 %v382, 8
        %v842 = vpop.permute.xlu0 %841
        %843 = vrot.lane.b32.xlu0 %v383, 8
        %v844 = vpop.permute.xlu0 %843
        %845 = vrot.lane.b32.xlu0 %v384, 8
        %v846 = vpop.permute.xlu0 %845
        %847 = vrot.lane.b32.xlu0 %v385, 8
        %v848 = vpop.permute.xlu0 %847
        %849 = vrot.lane.b32.xlu0 %v386, 8
        %v850 = vpop.permute.xlu0 %849
        %851 = vrot.lane.b32.xlu0 %v387, 8
        %v852 = vpop.permute.xlu0 %851
        %853 = vrot.lane.b32.xlu0 %v388, 8
        %v854 = vpop.permute.xlu0 %853
        %855 = vrot.lane.b32.xlu0 %v389, 8
        %v856 = vpop.permute.xlu0 %855
        %857 = vrot.lane.b32.xlu0 %v390, 8
        %v858 = vpop.permute.xlu0 %857
        %859 = vrot.lane.b32.xlu0 %v391, 8
        %v860 = vpop.permute.xlu0 %859
        %861 = vrot.lane.b32.xlu0 %v392, 8
        %v862 = vpop.permute.xlu0 %861
        %863 = vrot.lane.b32.xlu0 %v393, 8
        %v864 = vpop.permute.xlu0 %863
        %865 = vrot.lane.b32.xlu0 %v394, 8
        %v866 = vpop.permute.xlu0 %865
        %867 = vrot.lane.b32.xlu0 %v395, 8
        %v868 = vpop.permute.xlu0 %867
        %869 = vrot.lane.b32.xlu0 %v396, 8
        %v870 = vpop.permute.xlu0 %869
        %871 = vrot.lane.b32.xlu0 %v397, 8
        %v872 = vpop.permute.xlu0 %871
        %873 = vrot.lane.b32.xlu0 %v398, 8
        %v874 = vpop.permute.xlu0 %873
        %875 = vrot.lane.b32.xlu0 %v399, 8
        %v876 = vpop.permute.xlu0 %875
        %877 = vrot.lane.b32.xlu0 %v400, 8
        %v878 = vpop.permute.xlu0 %877
        %879 = vrot.lane.b32.xlu0 %v401, 8
        %v880 = vpop.permute.xlu0 %879
        %953 = vrot.lane.b32.xlu0 %v404, 12
        %v954 = vpop.permute.xlu0 %953
        %955 = vrot.lane.b32.xlu0 %v405, 12
        %v956 = vpop.permute.xlu0 %955
        %957 = vrot.lane.b32.xlu0 %v406, 12
        %v958 = vpop.permute.xlu0 %957
        %959 = vrot.lane.b32.xlu0 %v407, 12
        %v960 = vpop.permute.xlu0 %959
        %961 = vrot.lane.b32.xlu0 %v408, 12
        %v962 = vpop.permute.xlu0 %961
        %963 = vrot.lane.b32.xlu0 %v409, 12
        %v964 = vpop.permute.xlu0 %963
        %965 = vrot.lane.b32.xlu0 %v410, 12
        %v966 = vpop.permute.xlu0 %965
        %967 = vrot.lane.b32.xlu0 %v411, 12
        %v968 = vpop.permute.xlu0 %967
        %969 = vrot.lane.b32.xlu0 %v412, 12
        %v970 = vpop.permute.xlu0 %969
        %971 = vrot.lane.b32.xlu0 %v413, 12
        %v972 = vpop.permute.xlu0 %971
        %973 = vrot.lane.b32.xlu0 %v414, 12
        %v974 = vpop.permute.xlu0 %973
        %975 = vrot.lane.b32.xlu0 %v415, 12
        %v976 = vpop.permute.xlu0 %975
        %977 = vrot.lane.b32.xlu0 %v416, 12
        %v978 = vpop.permute.xlu0 %977
        %979 = vrot.lane.b32.xlu0 %v417, 12
        %v980 = vpop.permute.xlu0 %979
        %981 = vrot.lane.b32.xlu0 %v418, 12
        %v982 = vpop.permute.xlu0 %981
        %983 = vrot.lane.b32.xlu0 %v419, 12
        %v984 = vpop.permute.xlu0 %983
        %985 = vrot.lane.b32.xlu0 %v420, 12
        %v986 = vpop.permute.xlu0 %985
        %987 = vrot.lane.b32.xlu0 %v421, 12
        %v988 = vpop.permute.xlu0 %987
        %989 = vrot.lane.b32.xlu0 %v422, 12
        %v990 = vpop.permute.xlu0 %989
        %991 = vrot.lane.b32.xlu0 %v423, 12
        %v992 = vpop.permute.xlu0 %991
        %993 = vrot.lane.b32.xlu0 %v424, 12
        %v994 = vpop.permute.xlu0 %993
        %995 = vrot.lane.b32.xlu0 %v425, 12
        %v996 = vpop.permute.xlu0 %995
        %997 = vrot.lane.b32.xlu0 %v426, 12
        %v998 = vpop.permute.xlu0 %997
        %999 = vrot.lane.b32.xlu0 %v427, 12
        %v1000 = vpop.permute.xlu0 %999
        %1001 = vrot.lane.b32.xlu0 %v428, 12
        %v1002 = vpop.permute.xlu0 %1001
        %1003 = vrot.lane.b32.xlu0 %v429, 12
        %v1004 = vpop.permute.xlu0 %1003
        %1005 = vrot.lane.b32.xlu0 %v430, 12
        %v1006 = vpop.permute.xlu0 %1005
        %1007 = vrot.lane.b32.xlu0 %v431, 12
        %v1008 = vpop.permute.xlu0 %1007
        %1009 = vrot.lane.b32.xlu0 %v432, 12
        %v1010 = vpop.permute.xlu0 %1009
        %1011 = vrot.lane.b32.xlu0 %v433, 12
        %v1012 = vpop.permute.xlu0 %1011
        %1013 = vrot.lane.b32.xlu0 %v434, 12
        %v1014 = vpop.permute.xlu0 %1013
        %1015 = vrot.lane.b32.xlu0 %v435, 12
        %v1016 = vpop.permute.xlu0 %1015
        %1017 = vrot.lane.b32.xlu0 %v436, 12
        %v1018 = vpop.permute.xlu0 %1017
        %1019 = vrot.lane.b32.xlu0 %v437, 12
        %v1020 = vpop.permute.xlu0 %1019
        %1021 = vrot.lane.b32.xlu0 %v438, 12
        %v1022 = vpop.permute.xlu0 %1021
        %1023 = vrot.lane.b32.xlu0 %v439, 12
        %v1024 = vpop.permute.xlu0 %1023
        %1097 = vrot.lane.b32.xlu0 %v441, 16
        %v1098 = vpop.permute.xlu0 %1097
        %1099 = vrot.lane.b32.xlu0 %v442, 16
        %v1100 = vpop.permute.xlu0 %1099
        %1101 = vrot.lane.b32.xlu0 %v443, 16
        %v1102 = vpop.permute.xlu0 %1101
        %1103 = vrot.lane.b32.xlu0 %v444, 16
        %v1104 = vpop.permute.xlu0 %1103
        %1105 = vrot.lane.b32.xlu0 %v445, 16
        %v1106 = vpop.permute.xlu0 %1105
        %1107 = vrot.lane.b32.xlu0 %v446, 16
        %v1108 = vpop.permute.xlu0 %1107
        %1109 = vrot.lane.b32.xlu0 %v447, 16
        %v1110 = vpop.permute.xlu0 %1109
        %1111 = vrot.lane.b32.xlu0 %v448, 16
        %v1112 = vpop.permute.xlu0 %1111
        %1113 = vrot.lane.b32.xlu0 %v449, 16
        %v1114 = vpop.permute.xlu0 %1113
        %1115 = vrot.lane.b32.xlu0 %v450, 16
        %v1116 = vpop.permute.xlu0 %1115
        %1117 = vrot.lane.b32.xlu0 %v451, 16
        %v1118 = vpop.permute.xlu0 %1117
        %1119 = vrot.lane.b32.xlu0 %v452, 16
        %v1120 = vpop.permute.xlu0 %1119
        %1121 = vrot.lane.b32.xlu0 %v453, 16
        %v1122 = vpop.permute.xlu0 %1121
        %1123 = vrot.lane.b32.xlu0 %v454, 16
        %v1124 = vpop.permute.xlu0 %1123
        %1125 = vrot.lane.b32.xlu0 %v455, 16
        %v1126 = vpop.permute.xlu0 %1125
        %1127 = vrot.lane.b32.xlu0 %v456, 16
        %v1128 = vpop.permute.xlu0 %1127
        %1129 = vrot.lane.b32.xlu0 %v457, 16
        %v1130 = vpop.permute.xlu0 %1129
        %1131 = vrot.lane.b32.xlu0 %v458, 16
        %v1132 = vpop.permute.xlu0 %1131
        %1133 = vrot.lane.b32.xlu0 %v459, 16
        %v1134 = vpop.permute.xlu0 %1133
        %1135 = vrot.lane.b32.xlu0 %v460, 16
        %v1136 = vpop.permute.xlu0 %1135
        %1137 = vrot.lane.b32.xlu0 %v461, 16
        %v1138 = vpop.permute.xlu0 %1137
        %1139 = vrot.lane.b32.xlu0 %v462, 16
        %v1140 = vpop.permute.xlu0 %1139
        %1141 = vrot.lane.b32.xlu0 %v463, 16
        %v1142 = vpop.permute.xlu0 %1141
        %1143 = vrot.lane.b32.xlu0 %v464, 16
        %v1144 = vpop.permute.xlu0 %1143
        %1145 = vrot.lane.b32.xlu0 %v465, 16
        %v1146 = vpop.permute.xlu0 %1145
        %1147 = vrot.lane.b32.xlu0 %v466, 16
        %v1148 = vpop.permute.xlu0 %1147
        %1149 = vrot.lane.b32.xlu0 %v467, 16
        %v1150 = vpop.permute.xlu0 %1149
        %1151 = vrot.lane.b32.xlu0 %v468, 16
        %v1152 = vpop.permute.xlu0 %1151
        %1153 = vrot.lane.b32.xlu0 %v469, 16
        %v1154 = vpop.permute.xlu0 %1153
        %1155 = vrot.lane.b32.xlu0 %v470, 16
        %v1156 = vpop.permute.xlu0 %1155
        %1157 = vrot.lane.b32.xlu0 %v471, 16
        %v1158 = vpop.permute.xlu0 %1157
        %1159 = vrot.lane.b32.xlu0 %v472, 16
        %v1160 = vpop.permute.xlu0 %1159
        %1161 = vrot.lane.b32.xlu0 %v473, 16
        %v1162 = vpop.permute.xlu0 %1161
        %1163 = vrot.lane.b32.xlu0 %v474, 16
        %v1164 = vpop.permute.xlu0 %1163
        %1165 = vrot.lane.b32.xlu0 %v475, 16
        %v1166 = vpop.permute.xlu0 %1165
        %1167 = vrot.lane.b32.xlu0 %v476, 16
        %v1168 = vpop.permute.xlu0 %1167
        %1241 = vrot.lane.b32.xlu0 %v479, 20
        %v1242 = vpop.permute.xlu0 %1241
        %1243 = vrot.lane.b32.xlu0 %v480, 20
        %v1244 = vpop.permute.xlu0 %1243
        %1245 = vrot.lane.b32.xlu0 %v481, 20
        %v1246 = vpop.permute.xlu0 %1245
        %1247 = vrot.lane.b32.xlu0 %v482, 20
        %v1248 = vpop.permute.xlu0 %1247
        %1249 = vrot.lane.b32.xlu0 %v483, 20
        %v1250 = vpop.permute.xlu0 %1249
        %1251 = vrot.lane.b32.xlu0 %v484, 20
        %v1252 = vpop.permute.xlu0 %1251
        %1253 = vrot.lane.b32.xlu0 %v485, 20
        %v1254 = vpop.permute.xlu0 %1253
        %1255 = vrot.lane.b32.xlu0 %v486, 20
        %v1256 = vpop.permute.xlu0 %1255
        %1257 = vrot.lane.b32.xlu0 %v487, 20
        %v1258 = vpop.permute.xlu0 %1257
        %1259 = vrot.lane.b32.xlu0 %v488, 20
        %v1260 = vpop.permute.xlu0 %1259
        %1261 = vrot.lane.b32.xlu0 %v489, 20
        %v1262 = vpop.permute.xlu0 %1261
        %1263 = vrot.lane.b32.xlu0 %v490, 20
        %v1264 = vpop.permute.xlu0 %1263
        %1265 = vrot.lane.b32.xlu0 %v491, 20
        %v1266 = vpop.permute.xlu0 %1265
        %1267 = vrot.lane.b32.xlu0 %v492, 20
        %v1268 = vpop.permute.xlu0 %1267
        %1269 = vrot.lane.b32.xlu0 %v493, 20
        %v1270 = vpop.permute.xlu0 %1269
        %1271 = vrot.lane.b32.xlu0 %v494, 20
        %v1272 = vpop.permute.xlu0 %1271
        %1273 = vrot.lane.b32.xlu0 %v495, 20
        %v1274 = vpop.permute.xlu0 %1273
        %1275 = vrot.lane.b32.xlu0 %v496, 20
        %v1276 = vpop.permute.xlu0 %1275
        %1277 = vrot.lane.b32.xlu0 %v497, 20
        %v1278 = vpop.permute.xlu0 %1277
        %1279 = vrot.lane.b32.xlu0 %v498, 20
        %v1280 = vpop.permute.xlu0 %1279
        %1281 = vrot.lane.b32.xlu0 %v499, 20
        %v1282 = vpop.permute.xlu0 %1281
        %1283 = vrot.lane.b32.xlu0 %v500, 20
        %v1284 = vpop.permute.xlu0 %1283
        %1285 = vrot.lane.b32.xlu0 %v501, 20
        %v1286 = vpop.permute.xlu0 %1285
        %1287 = vrot.lane.b32.xlu0 %v502, 20
        %v1288 = vpop.permute.xlu0 %1287
        %1289 = vrot.lane.b32.xlu0 %v503, 20
        %v1290 = vpop.permute.xlu0 %1289
        %1291 = vrot.lane.b32.xlu0 %v504, 20
        %v1292 = vpop.permute.xlu0 %1291
        %1293 = vrot.lane.b32.xlu0 %v505, 20
        %v1294 = vpop.permute.xlu0 %1293
        %1295 = vrot.lane.b32.xlu0 %v506, 20
        %v1296 = vpop.permute.xlu0 %1295
        %1297 = vrot.lane.b32.xlu0 %v507, 20
        %v1298 = vpop.permute.xlu0 %1297
        %1299 = vrot.lane.b32.xlu0 %v508, 20
        %v1300 = vpop.permute.xlu0 %1299
        %1301 = vrot.lane.b32.xlu0 %v509, 20
        %v1302 = vpop.permute.xlu0 %1301
        %1303 = vrot.lane.b32.xlu0 %v510, 20
        %v1304 = vpop.permute.xlu0 %1303
        %1305 = vrot.lane.b32.xlu0 %v511, 20
        %v1306 = vpop.permute.xlu0 %1305
        %1307 = vrot.lane.b32.xlu0 %v512, 20
        %v1308 = vpop.permute.xlu0 %1307
        %1309 = vrot.lane.b32.xlu0 %v513, 20
        %v1310 = vpop.permute.xlu0 %1309
        %1311 = vrot.lane.b32.xlu0 %v514, 20
        %v1312 = vpop.permute.xlu0 %1311
        %1385 = vrot.lane.b32.xlu0 %v517, 24
        %v1386 = vpop.permute.xlu0 %1385
        %1387 = vrot.lane.b32.xlu0 %v518, 24
        %v1388 = vpop.permute.xlu0 %1387
        %1389 = vrot.lane.b32.xlu0 %v519, 24
        %v1390 = vpop.permute.xlu0 %1389
        %1391 = vrot.lane.b32.xlu0 %v520, 24
        %v1392 = vpop.permute.xlu0 %1391
        %1393 = vrot.lane.b32.xlu0 %v521, 24
        %v1394 = vpop.permute.xlu0 %1393
        %1395 = vrot.lane.b32.xlu0 %v522, 24
        %v1396 = vpop.permute.xlu0 %1395
        %1397 = vrot.lane.b32.xlu0 %v523, 24
        %v1398 = vpop.permute.xlu0 %1397
        %1399 = vrot.lane.b32.xlu0 %v524, 24
        %v1400 = vpop.permute.xlu0 %1399
        %1401 = vrot.lane.b32.xlu0 %v525, 24
        %v1402 = vpop.permute.xlu0 %1401
        %1403 = vrot.lane.b32.xlu0 %v526, 24
        %v1404 = vpop.permute.xlu0 %1403
        %1405 = vrot.lane.b32.xlu0 %v527, 24
        %v1406 = vpop.permute.xlu0 %1405
        %1407 = vrot.lane.b32.xlu0 %v528, 24
        %v1408 = vpop.permute.xlu0 %1407
        %1409 = vrot.lane.b32.xlu0 %v529, 24
        %v1410 = vpop.permute.xlu0 %1409
        %1411 = vrot.lane.b32.xlu0 %v530, 24
        %v1412 = vpop.permute.xlu0 %1411
        %1413 = vrot.lane.b32.xlu0 %v531, 24
        %v1414 = vpop.permute.xlu0 %1413
        %1415 = vrot.lane.b32.xlu0 %v532, 24
        %v1416 = vpop.permute.xlu0 %1415
        %1417 = vrot.lane.b32.xlu0 %v533, 24
        %v1418 = vpop.permute.xlu0 %1417
        %1419 = vrot.lane.b32.xlu0 %v534, 24
        %v1420 = vpop.permute.xlu0 %1419
        %1421 = vrot.lane.b32.xlu0 %v535, 24
        %v1422 = vpop.permute.xlu0 %1421
        %1423 = vrot.lane.b32.xlu0 %v536, 24
        %v1424 = vpop.permute.xlu0 %1423
        %1425 = vrot.lane.b32.xlu0 %v537, 24
        %v1426 = vpop.permute.xlu0 %1425
        %1427 = vrot.lane.b32.xlu0 %v538, 24
        %v1428 = vpop.permute.xlu0 %1427
        %1429 = vrot.lane.b32.xlu0 %v539, 24
        %v1430 = vpop.permute.xlu0 %1429
        %1431 = vrot.lane.b32.xlu0 %v540, 24
        %v1432 = vpop.permute.xlu0 %1431
        %1433 = vrot.lane.b32.xlu0 %v541, 24
        %v1434 = vpop.permute.xlu0 %1433
        %1435 = vrot.lane.b32.xlu0 %v542, 24
        %v1436 = vpop.permute.xlu0 %1435
        %1437 = vrot.lane.b32.xlu0 %v543, 24
        %v1438 = vpop.permute.xlu0 %1437
        %1439 = vrot.lane.b32.xlu0 %v544, 24
        %v1440 = vpop.permute.xlu0 %1439
        %1441 = vrot.lane.b32.xlu0 %v545, 24
        %v1442 = vpop.permute.xlu0 %1441
        %1443 = vrot.lane.b32.xlu0 %v546, 24
        %v1444 = vpop.permute.xlu0 %1443
        %1445 = vrot.lane.b32.xlu0 %v547, 24
        %v1446 = vpop.permute.xlu0 %1445
        %1447 = vrot.lane.b32.xlu0 %v548, 24
        %v1448 = vpop.permute.xlu0 %1447
        %1449 = vrot.lane.b32.xlu0 %v549, 24
        %v1450 = vpop.permute.xlu0 %1449
        %1451 = vrot.lane.b32.xlu0 %v550, 24
        %v1452 = vpop.permute.xlu0 %1451
        %1453 = vrot.lane.b32.xlu0 %v551, 24
        %v1454 = vpop.permute.xlu0 %1453
        %1455 = vrot.lane.b32.xlu0 %v552, 24
        %v1456 = vpop.permute.xlu0 %1455
        %1529 = vrot.lane.b32.xlu0 %v555, 28
        %v1530 = vpop.permute.xlu0 %1529
        %1531 = vrot.lane.b32.xlu0 %v556, 28
        %v1532 = vpop.permute.xlu0 %1531
        %1533 = vrot.lane.b32.xlu0 %v557, 28
        %v1534 = vpop.permute.xlu0 %1533
        %1535 = vrot.lane.b32.xlu0 %v558, 28
        %v1536 = vpop.permute.xlu0 %1535
        %1537 = vrot.lane.b32.xlu0 %v559, 28
        %v1538 = vpop.permute.xlu0 %1537
        %1539 = vrot.lane.b32.xlu0 %v560, 28
        %v1540 = vpop.permute.xlu0 %1539
        %1541 = vrot.lane.b32.xlu0 %v561, 28
        %v1542 = vpop.permute.xlu0 %1541
        %1543 = vrot.lane.b32.xlu0 %v562, 28
        %v1544 = vpop.permute.xlu0 %1543
        %1545 = vrot.lane.b32.xlu0 %v563, 28
        %v1546 = vpop.permute.xlu0 %1545
        %1547 = vrot.lane.b32.xlu0 %v564, 28
        %v1548 = vpop.permute.xlu0 %1547
        %1549 = vrot.lane.b32.xlu0 %v565, 28
        %v1550 = vpop.permute.xlu0 %1549
        %1551 = vrot.lane.b32.xlu0 %v566, 28
        %v1552 = vpop.permute.xlu0 %1551
        %1553 = vrot.lane.b32.xlu0 %v567, 28
        %v1554 = vpop.permute.xlu0 %1553
        %1555 = vrot.lane.b32.xlu0 %v568, 28
        %v1556 = vpop.permute.xlu0 %1555
        %1557 = vrot.lane.b32.xlu0 %v569, 28
        %v1558 = vpop.permute.xlu0 %1557
        %1559 = vrot.lane.b32.xlu0 %v570, 28
        %v1560 = vpop.permute.xlu0 %1559
        %1561 = vrot.lane.b32.xlu0 %v571, 28
        %v1562 = vpop.permute.xlu0 %1561
        %1563 = vrot.lane.b32.xlu0 %v572, 28
        %v1564 = vpop.permute.xlu0 %1563
        %1565 = vrot.lane.b32.xlu0 %v573, 28
        %v1566 = vpop.permute.xlu0 %1565
        %1567 = vrot.lane.b32.xlu0 %v574, 28
        %v1568 = vpop.permute.xlu0 %1567
        %1569 = vrot.lane.b32.xlu0 %v575, 28
        %v1570 = vpop.permute.xlu0 %1569
        %1571 = vrot.lane.b32.xlu0 %v576, 28
        %v1572 = vpop.permute.xlu0 %1571
        %1573 = vrot.lane.b32.xlu0 %v577, 28
        %v1574 = vpop.permute.xlu0 %1573
        %1575 = vrot.lane.b32.xlu0 %v578, 28
        %v1576 = vpop.permute.xlu0 %1575
        %1577 = vrot.lane.b32.xlu0 %v579, 28
        %v1578 = vpop.permute.xlu0 %1577
        %1579 = vrot.lane.b32.xlu0 %v580, 28
        %v1580 = vpop.permute.xlu0 %1579
        %1581 = vrot.lane.b32.xlu0 %v581, 28
        %v1582 = vpop.permute.xlu0 %1581
        %1583 = vrot.lane.b32.xlu0 %v582, 28
        %v1584 = vpop.permute.xlu0 %1583
        %1585 = vrot.lane.b32.xlu0 %v583, 28
        %v1586 = vpop.permute.xlu0 %1585
        %1587 = vrot.lane.b32.xlu0 %v584, 28
        %v1588 = vpop.permute.xlu0 %1587
        %1589 = vrot.lane.b32.xlu0 %v585, 28
        %v1590 = vpop.permute.xlu0 %1589
        %1591 = vrot.lane.b32.xlu0 %v586, 28
        %v1592 = vpop.permute.xlu0 %1591
        %1593 = vrot.lane.b32.xlu0 %v587, 28
        %v1594 = vpop.permute.xlu0 %1593
        %1595 = vrot.lane.b32.xlu0 %v588, 28
        %v1596 = vpop.permute.xlu0 %1595
        %1597 = vrot.lane.b32.xlu0 %v589, 28
        %v1598 = vpop.permute.xlu0 %1597
        %1599 = vrot.lane.b32.xlu0 %v590, 28
        %v1600 = vpop.permute.xlu0 %1599
        %1673 = vrot.lane.b32.xlu0 %v593, 32
        %v1674 = vpop.permute.xlu0 %1673
        %1675 = vrot.lane.b32.xlu0 %v594, 32
        %v1676 = vpop.permute.xlu0 %1675
        %1677 = vrot.lane.b32.xlu0 %v595, 32
        %v1678 = vpop.permute.xlu0 %1677
        %1679 = vrot.lane.b32.xlu0 %v596, 32
        %v1680 = vpop.permute.xlu0 %1679
        %1681 = vrot.lane.b32.xlu0 %v597, 32
        %v1682 = vpop.permute.xlu0 %1681
        %1683 = vrot.lane.b32.xlu0 %v598, 32
        %v1684 = vpop.permute.xlu0 %1683
        %1685 = vrot.lane.b32.xlu0 %v599, 32
        %v1686 = vpop.permute.xlu0 %1685
        %1687 = vrot.lane.b32.xlu0 %v600, 32
        %v1688 = vpop.permute.xlu0 %1687
        %1689 = vrot.lane.b32.xlu0 %v601, 32
        %v1690 = vpop.permute.xlu0 %1689
        %1691 = vrot.lane.b32.xlu0 %v602, 32
        %v1692 = vpop.permute.xlu0 %1691
        %1693 = vrot.lane.b32.xlu0 %v603, 32
        %v1694 = vpop.permute.xlu0 %1693
        %1695 = vrot.lane.b32.xlu0 %v604, 32
        %v1696 = vpop.permute.xlu0 %1695
        %1697 = vrot.lane.b32.xlu0 %v605, 32
        %v1698 = vpop.permute.xlu0 %1697
        %1699 = vrot.lane.b32.xlu0 %v606, 32
        %v1700 = vpop.permute.xlu0 %1699
        %1701 = vrot.lane.b32.xlu0 %v607, 32
        %v1702 = vpop.permute.xlu0 %1701
        %1703 = vrot.lane.b32.xlu0 %v608, 32
        %v1704 = vpop.permute.xlu0 %1703
        %1705 = vrot.lane.b32.xlu0 %v609, 32
        %v1706 = vpop.permute.xlu0 %1705
        %1707 = vrot.lane.b32.xlu0 %v610, 32
        %v1708 = vpop.permute.xlu0 %1707
        %1709 = vrot.lane.b32.xlu0 %v611, 32
        %v1710 = vpop.permute.xlu0 %1709
        %1711 = vrot.lane.b32.xlu0 %v612, 32
        %v1712 = vpop.permute.xlu0 %1711
        %1713 = vrot.lane.b32.xlu0 %v613, 32
        %v1714 = vpop.permute.xlu0 %1713
        %1715 = vrot.lane.b32.xlu0 %v614, 32
        %v1716 = vpop.permute.xlu0 %1715
        %1717 = vrot.lane.b32.xlu0 %v615, 32
        %v1718 = vpop.permute.xlu0 %1717
        %1719 = vrot.lane.b32.xlu0 %v616, 32
        %v1720 = vpop.permute.xlu0 %1719
        %1721 = vrot.lane.b32.xlu0 %v617, 32
        %v1722 = vpop.permute.xlu0 %1721
        %1723 = vrot.lane.b32.xlu0 %v618, 32
        %v1724 = vpop.permute.xlu0 %1723
        %1725 = vrot.lane.b32.xlu0 %v619, 32
        %v1726 = vpop.permute.xlu0 %1725
        %1727 = vrot.lane.b32.xlu0 %v620, 32
        %v1728 = vpop.permute.xlu0 %1727
        %1729 = vrot.lane.b32.xlu0 %v621, 32
        %v1730 = vpop.permute.xlu0 %1729
        %1731 = vrot.lane.b32.xlu0 %v622, 32
        %v1732 = vpop.permute.xlu0 %1731
        %1733 = vrot.lane.b32.xlu0 %v623, 32
        %v1734 = vpop.permute.xlu0 %1733
        %1735 = vrot.lane.b32.xlu0 %v624, 32
        %v1736 = vpop.permute.xlu0 %1735
        %1737 = vrot.lane.b32.xlu0 %v625, 32
        %v1738 = vpop.permute.xlu0 %1737
        %1739 = vrot.lane.b32.xlu0 %v626, 32
        %v1740 = vpop.permute.xlu0 %1739
        %1741 = vrot.lane.b32.xlu0 %v627, 32
        %v1742 = vpop.permute.xlu0 %1741
        %1743 = vrot.lane.b32.xlu0 %v628, 32
        %v1744 = vpop.permute.xlu0 %1743
        %vm1781 = vcmask 31744
        %v1782 = vsel %vm1781, %v290, %v666
        %v1783 = vsel %vm1781, %v291, %v668
        %v1784 = vsel %vm1781, %v292, %v670
        %v1785 = vsel %vm1781, %v293, %v672
        %v1786 = vsel %vm1781, %v294, %v674
        %v1787 = vsel %vm1781, %v295, %v676
        %v1788 = vsel %vm1781, %v296, %v678
        %v1789 = vsel %vm1781, %v297, %v680
        %v1790 = vsel %vm1781, %v298, %v682
        %v1791 = vsel %vm1781, %v299, %v684
        %v1792 = vsel %vm1781, %v300, %v686
        %v1793 = vsel %vm1781, %v301, %v688
        %v1794 = vsel %vm1781, %v302, %v690
        %v1795 = vsel %vm1781, %v303, %v692
        %v1796 = vsel %vm1781, %v304, %v694
        %v1797 = vsel %vm1781, %v305, %v696
        %v1798 = vsel %vm1781, %v306, %v698
        %v1799 = vsel %vm1781, %v307, %v700
        %v1800 = vsel %vm1781, %v308, %v702
        %v1801 = vsel %vm1781, %v309, %v704
        %v1802 = vsel %vm1781, %v310, %v706
        %v1803 = vsel %vm1781, %v311, %v708
        %v1804 = vsel %vm1781, %v312, %v710
        %v1805 = vsel %vm1781, %v313, %v712
        %v1806 = vsel %vm1781, %v314, %v714
        %v1807 = vsel %vm1781, %v315, %v716
        %v1808 = vsel %vm1781, %v316, %v718
        %v1809 = vsel %vm1781, %v317, %v720
        %v1810 = vsel %vm1781, %v318, %v722
        %v1811 = vsel %vm1781, %v319, %v724
        %v1812 = vsel %vm1781, %v320, %v726
        %v1813 = vsel %vm1781, %v321, %v728
        %v1814 = vsel %vm1781, %v322, %v730
        %v1815 = vsel %vm1781, %v323, %v732
        %v1816 = vsel %vm1781, %v324, %v734
        %v1817 = vsel %vm1781, %v325, %v736
        %vm1818 = vcmask 64512
        %v1819 = vsel %vm1818, %v1782, %v810
        %v1820 = vsel %vm1818, %v1783, %v812
        %v1821 = vsel %vm1818, %v1784, %v814
        %v1822 = vsel %vm1818, %v1785, %v816
        %v1823 = vsel %vm1818, %v1786, %v818
        %v1824 = vsel %vm1818, %v1787, %v820
        %v1825 = vsel %vm1818, %v1788, %v822
        %v1826 = vsel %vm1818, %v1789, %v824
        %v1827 = vsel %vm1818, %v1790, %v826
        %v1828 = vsel %vm1818, %v1791, %v828
        %v1829 = vsel %vm1818, %v1792, %v830
        %v1830 = vsel %vm1818, %v1793, %v832
        %v1831 = vsel %vm1818, %v1794, %v834
        %v1832 = vsel %vm1818, %v1795, %v836
        %v1833 = vsel %vm1818, %v1796, %v838
        %v1834 = vsel %vm1818, %v1797, %v840
        %v1835 = vsel %vm1818, %v1798, %v842
        %v1836 = vsel %vm1818, %v1799, %v844
        %v1837 = vsel %vm1818, %v1800, %v846
        %v1838 = vsel %vm1818, %v1801, %v848
        %v1839 = vsel %vm1818, %v1802, %v850
        %v1840 = vsel %vm1818, %v1803, %v852
        %v1841 = vsel %vm1818, %v1804, %v854
        %v1842 = vsel %vm1818, %v1805, %v856
        %v1843 = vsel %vm1818, %v1806, %v858
        %v1844 = vsel %vm1818, %v1807, %v860
        %v1845 = vsel %vm1818, %v1808, %v862
        %v1846 = vsel %vm1818, %v1809, %v864
        %v1847 = vsel %vm1818, %v1810, %v866
        %v1848 = vsel %vm1818, %v1811, %v868
        %v1849 = vsel %vm1818, %v1812, %v870
        %v1850 = vsel %vm1818, %v1813, %v872
        %v1851 = vsel %vm1818, %v1814, %v874
        %v1852 = vsel %vm1818, %v1815, %v876
        %v1853 = vsel %vm1818, %v1816, %v878
        %v1854 = vsel %vm1818, %v1817, %v880
        %vm1855 = vcmask 97280
        %v1856 = vsel %vm1855, %v1819, %v954
        %v1857 = vsel %vm1855, %v1820, %v956
        %v1858 = vsel %vm1855, %v1821, %v958
        %v1859 = vsel %vm1855, %v1822, %v960
        %v1860 = vsel %vm1855, %v1823, %v962
        %v1861 = vsel %vm1855, %v1824, %v964
        %v1862 = vsel %vm1855, %v1825, %v966
        %v1863 = vsel %vm1855, %v1826, %v968
        %v1864 = vsel %vm1855, %v1827, %v970
        %v1865 = vsel %vm1855, %v1828, %v972
        %v1866 = vsel %vm1855, %v1829, %v974
        %v1867 = vsel %vm1855, %v1830, %v976
        %v1868 = vsel %vm1855, %v1831, %v978
        %v1869 = vsel %vm1855, %v1832, %v980
        %v1870 = vsel %vm1855, %v1833, %v982
        %v1871 = vsel %vm1855, %v1834, %v984
        %v1872 = vsel %vm1855, %v1835, %v986
        %v1873 = vsel %vm1855, %v1836, %v988
        %v1874 = vsel %vm1855, %v1837, %v990
        %v1875 = vsel %vm1855, %v1838, %v992
        %v1876 = vsel %vm1855, %v1839, %v994
        %v1877 = vsel %vm1855, %v1840, %v996
        %v1878 = vsel %vm1855, %v1841, %v998
        %v1879 = vsel %vm1855, %v1842, %v1000
        %v1880 = vsel %vm1855, %v1843, %v1002
        %v1881 = vsel %vm1855, %v1844, %v1004
        %v1882 = vsel %vm1855, %v1845, %v1006
        %v1883 = vsel %vm1855, %v1846, %v1008
        %v1884 = vsel %vm1855, %v1847, %v1010
        %v1885 = vsel %vm1855, %v1848, %v1012
        %v1886 = vsel %vm1855, %v1849, %v1014
        %v1887 = vsel %vm1855, %v1850, %v1016
        %v1888 = vsel %vm1855, %v1851, %v1018
        %v1889 = vsel %vm1855, %v1852, %v1020
        %v1890 = vsel %vm1855, %v1853, %v1022
        %v1891 = vsel %vm1855, %v1854, %v1024
        %vm1892 = vcmask 130048
        %v1893 = vsel %vm1892, %v1856, %v1098
        %v1894 = vsel %vm1892, %v1857, %v1100
        %v1895 = vsel %vm1892, %v1858, %v1102
        %v1896 = vsel %vm1892, %v1859, %v1104
        %v1897 = vsel %vm1892, %v1860, %v1106
        %v1898 = vsel %vm1892, %v1861, %v1108
        %v1899 = vsel %vm1892, %v1862, %v1110
        %v1900 = vsel %vm1892, %v1863, %v1112
        %v1901 = vsel %vm1892, %v1864, %v1114
        %v1902 = vsel %vm1892, %v1865, %v1116
        %v1903 = vsel %vm1892, %v1866, %v1118
        %v1904 = vsel %vm1892, %v1867, %v1120
        %v1905 = vsel %vm1892, %v1868, %v1122
        %v1906 = vsel %vm1892, %v1869, %v1124
        %v1907 = vsel %vm1892, %v1870, %v1126
        %v1908 = vsel %vm1892, %v1871, %v1128
        %v1909 = vsel %vm1892, %v1872, %v1130
        %v1910 = vsel %vm1892, %v1873, %v1132
        %v1911 = vsel %vm1892, %v1874, %v1134
        %v1912 = vsel %vm1892, %v1875, %v1136
        %v1913 = vsel %vm1892, %v1876, %v1138
        %v1914 = vsel %vm1892, %v1877, %v1140
        %v1915 = vsel %vm1892, %v1878, %v1142
        %v1916 = vsel %vm1892, %v1879, %v1144
        %v1917 = vsel %vm1892, %v1880, %v1146
        %v1918 = vsel %vm1892, %v1881, %v1148
        %v1919 = vsel %vm1892, %v1882, %v1150
        %v1920 = vsel %vm1892, %v1883, %v1152
        %v1921 = vsel %vm1892, %v1884, %v1154
        %v1922 = vsel %vm1892, %v1885, %v1156
        %v1923 = vsel %vm1892, %v1886, %v1158
        %v1924 = vsel %vm1892, %v1887, %v1160
        %v1925 = vsel %vm1892, %v1888, %v1162
        %v1926 = vsel %vm1892, %v1889, %v1164
        %v1927 = vsel %vm1892, %v1890, %v1166
        %v1928 = vsel %vm1892, %v1891, %v1168
        %vm1929 = vcmask 162816
        %v1930 = vsel %vm1929, %v1893, %v1242
        %v1931 = vsel %vm1929, %v1894, %v1244
        %v1932 = vsel %vm1929, %v1895, %v1246
        %v1933 = vsel %vm1929, %v1896, %v1248
        %v1934 = vsel %vm1929, %v1897, %v1250
        %v1935 = vsel %vm1929, %v1898, %v1252
        %v1936 = vsel %vm1929, %v1899, %v1254
        %v1937 = vsel %vm1929, %v1900, %v1256
        %v1938 = vsel %vm1929, %v1901, %v1258
        %v1939 = vsel %vm1929, %v1902, %v1260
        %v1940 = vsel %vm1929, %v1903, %v1262
        %v1941 = vsel %vm1929, %v1904, %v1264
        %v1942 = vsel %vm1929, %v1905, %v1266
        %v1943 = vsel %vm1929, %v1906, %v1268
        %v1944 = vsel %vm1929, %v1907, %v1270
        %v1945 = vsel %vm1929, %v1908, %v1272
        %v1946 = vsel %vm1929, %v1909, %v1274
        %v1947 = vsel %vm1929, %v1910, %v1276
        %v1948 = vsel %vm1929, %v1911, %v1278
        %v1949 = vsel %vm1929, %v1912, %v1280
        %v1950 = vsel %vm1929, %v1913, %v1282
        %v1951 = vsel %vm1929, %v1914, %v1284
        %v1952 = vsel %vm1929, %v1915, %v1286
        %v1953 = vsel %vm1929, %v1916, %v1288
        %v1954 = vsel %vm1929, %v1917, %v1290
        %v1955 = vsel %vm1929, %v1918, %v1292
        %v1956 = vsel %vm1929, %v1919, %v1294
        %v1957 = vsel %vm1929, %v1920, %v1296
        %v1958 = vsel %vm1929, %v1921, %v1298
        %v1959 = vsel %vm1929, %v1922, %v1300
        %v1960 = vsel %vm1929, %v1923, %v1302
        %v1961 = vsel %vm1929, %v1924, %v1304
        %v1962 = vsel %vm1929, %v1925, %v1306
        %v1963 = vsel %vm1929, %v1926, %v1308
        %v1964 = vsel %vm1929, %v1927, %v1310
        %v1965 = vsel %vm1929, %v1928, %v1312
        %vm1966 = vcmask 195584
        %v1967 = vsel %vm1966, %v1930, %v1386
        %v1968 = vsel %vm1966, %v1931, %v1388
        %v1969 = vsel %vm1966, %v1932, %v1390
        %v1970 = vsel %vm1966, %v1933, %v1392
        %v1971 = vsel %vm1966, %v1934, %v1394
        %v1972 = vsel %vm1966, %v1935, %v1396
        %v1973 = vsel %vm1966, %v1936, %v1398
        %v1974 = vsel %vm1966, %v1937, %v1400
        %v1975 = vsel %vm1966, %v1938, %v1402
        %v1976 = vsel %vm1966, %v1939, %v1404
        %v1977 = vsel %vm1966, %v1940, %v1406
        %v1978 = vsel %vm1966, %v1941, %v1408
        %v1979 = vsel %vm1966, %v1942, %v1410
        %v1980 = vsel %vm1966, %v1943, %v1412
        %v1981 = vsel %vm1966, %v1944, %v1414
        %v1982 = vsel %vm1966, %v1945, %v1416
        %v1983 = vsel %vm1966, %v1946, %v1418
        %v1984 = vsel %vm1966, %v1947, %v1420
        %v1985 = vsel %vm1966, %v1948, %v1422
        %v1986 = vsel %vm1966, %v1949, %v1424
        %v1987 = vsel %vm1966, %v1950, %v1426
        %v1988 = vsel %vm1966, %v1951, %v1428
        %v1989 = vsel %vm1966, %v1952, %v1430
        %v1990 = vsel %vm1966, %v1953, %v1432
        %v1991 = vsel %vm1966, %v1954, %v1434
        %v1992 = vsel %vm1966, %v1955, %v1436
        %v1993 = vsel %vm1966, %v1956, %v1438
        %v1994 = vsel %vm1966, %v1957, %v1440
        %v1995 = vsel %vm1966, %v1958, %v1442
        %v1996 = vsel %vm1966, %v1959, %v1444
        %v1997 = vsel %vm1966, %v1960, %v1446
        %v1998 = vsel %vm1966, %v1961, %v1448
        %v1999 = vsel %vm1966, %v1962, %v1450
        %v2000 = vsel %vm1966, %v1963, %v1452
        %v2001 = vsel %vm1966, %v1964, %v1454
        %v2002 = vsel %vm1966, %v1965, %v1456
        %vm2003 = vcmask 228352
        %v2004 = vsel %vm2003, %v1967, %v1530
        %v2005 = vsel %vm2003, %v1968, %v1532
        %v2006 = vsel %vm2003, %v1969, %v1534
        %v2007 = vsel %vm2003, %v1970, %v1536
        %v2008 = vsel %vm2003, %v1971, %v1538
        %v2009 = vsel %vm2003, %v1972, %v1540
        %v2010 = vsel %vm2003, %v1973, %v1542
        %v2011 = vsel %vm2003, %v1974, %v1544
        %v2012 = vsel %vm2003, %v1975, %v1546
        %v2013 = vsel %vm2003, %v1976, %v1548
        %v2014 = vsel %vm2003, %v1977, %v1550
        %v2015 = vsel %vm2003, %v1978, %v1552
        %v2016 = vsel %vm2003, %v1979, %v1554
        %v2017 = vsel %vm2003, %v1980, %v1556
        %v2018 = vsel %vm2003, %v1981, %v1558
        %v2019 = vsel %vm2003, %v1982, %v1560
        %v2020 = vsel %vm2003, %v1983, %v1562
        %v2021 = vsel %vm2003, %v1984, %v1564
        %v2022 = vsel %vm2003, %v1985, %v1566
        %v2023 = vsel %vm2003, %v1986, %v1568
        %v2024 = vsel %vm2003, %v1987, %v1570
        %v2025 = vsel %vm2003, %v1988, %v1572
        %v2026 = vsel %vm2003, %v1989, %v1574
        %v2027 = vsel %vm2003, %v1990, %v1576
        %v2028 = vsel %vm2003, %v1991, %v1578
        %v2029 = vsel %vm2003, %v1992, %v1580
        %v2030 = vsel %vm2003, %v1993, %v1582
        %v2031 = vsel %vm2003, %v1994, %v1584
        %v2032 = vsel %vm2003, %v1995, %v1586
        %v2033 = vsel %vm2003, %v1996, %v1588
        %v2034 = vsel %vm2003, %v1997, %v1590
        %v2035 = vsel %vm2003, %v1998, %v1592
        %v2036 = vsel %vm2003, %v1999, %v1594
        %v2037 = vsel %vm2003, %v2000, %v1596
        %v2038 = vsel %vm2003, %v2001, %v1598
        %v2039 = vsel %vm2003, %v2002, %v1600
        %vm2040 = vcmask 261120
        %v2041 = vsel %vm2040, %v2004, %v1674
        %v2042 = vsel %vm2040, %v2005, %v1676
        %v2043 = vsel %vm2040, %v2006, %v1678
        %v2044 = vsel %vm2040, %v2007, %v1680
        %v2045 = vsel %vm2040, %v2008, %v1682
        %v2046 = vsel %vm2040, %v2009, %v1684
        %v2047 = vsel %vm2040, %v2010, %v1686
        %v2048 = vsel %vm2040, %v2011, %v1688
        %v2049 = vsel %vm2040, %v2012, %v1690
        %v2050 = vsel %vm2040, %v2013, %v1692
        %v2051 = vsel %vm2040, %v2014, %v1694
        %v2052 = vsel %vm2040, %v2015, %v1696
        %v2053 = vsel %vm2040, %v2016, %v1698
        %v2054 = vsel %vm2040, %v2017, %v1700
        %v2055 = vsel %vm2040, %v2018, %v1702
        %v2056 = vsel %vm2040, %v2019, %v1704
        %v2057 = vsel %vm2040, %v2020, %v1706
        %v2058 = vsel %vm2040, %v2021, %v1708
        %v2059 = vsel %vm2040, %v2022, %v1710
        %v2060 = vsel %vm2040, %v2023, %v1712
        %v2061 = vsel %vm2040, %v2024, %v1714
        %v2062 = vsel %vm2040, %v2025, %v1716
        %v2063 = vsel %vm2040, %v2026, %v1718
        %v2064 = vsel %vm2040, %v2027, %v1720
        %v2065 = vsel %vm2040, %v2028, %v1722
        %v2066 = vsel %vm2040, %v2029, %v1724
        %v2067 = vsel %vm2040, %v2030, %v1726
        %v2068 = vsel %vm2040, %v2031, %v1728
        %v2069 = vsel %vm2040, %v2032, %v1730
        %v2070 = vsel %vm2040, %v2033, %v1732
        %v2071 = vsel %vm2040, %v2034, %v1734
        %v2072 = vsel %vm2040, %v2035, %v1736
        %v2073 = vsel %vm2040, %v2036, %v1738
        %v2074 = vsel %vm2040, %v2037, %v1740
        %v2075 = vsel %vm2040, %v2038, %v1742
        %v2076 = vsel %vm2040, %v2039, %v1744
        %v2077 = vld [vmem:[%s279] sm:$0xff]
        %v2078 = vld [vmem:[%s279 + $0x8] sm:$0xff]
        %v2079 = vld [vmem:[%s279 + $0x10] sm:$0xff]
        %v2080 = vld [vmem:[%s279 + $0x18] sm:$0xff]
        %v2081 = vld [vmem:[%s279 + $0x20] sm:$0xff]
        %v2082 = vld [vmem:[%s279 + $0x28] sm:$0xff]
        %v2083 = vld [vmem:[%s279 + $0x30] sm:$0xff]
        %v2084 = vld [vmem:[%s279 + $0x38] sm:$0xff]
        %v2085 = vld [vmem:[%s279 + $0x40] sm:$0xff]
        %v2086 = vld [vmem:[%s279 + $0x48] sm:$0xff]
        %v2087 = vld [vmem:[%s279 + $0x50] sm:$0xff]
        %v2088 = vld [vmem:[%s279 + $0x58] sm:$0xff]
        %v2089 = vld [vmem:[%s279 + $0x60] sm:$0xff]
        %v2090 = vld [vmem:[%s279 + $0x68] sm:$0xff]
        %v2091 = vld [vmem:[%s279 + $0x70] sm:$0xff]
        %v2092 = vld [vmem:[%s279 + $0x78] sm:$0xff]
        %v2093 = vld [vmem:[%s279 + $0x80] sm:$0xff]
        %v2094 = vld [vmem:[%s279 + $0x88] sm:$0xff]
        %2096 = vset.pattern.permute.xlu0 0
        %2097 = vperm.xlu0 %2096, %v2077
        %v2098 = vpop.permute.xlu0 %2097
        %2101 = vset.pattern.permute.xlu0 0
        %2102 = vperm.xlu0 %2101, %v2078
        %v2103 = vpop.permute.xlu0 %2102
        %2106 = vset.pattern.permute.xlu0 0
        %2107 = vperm.xlu0 %2106, %v2079
        %v2108 = vpop.permute.xlu0 %2107
        %2111 = vset.pattern.permute.xlu0 0
        %2112 = vperm.xlu0 %2111, %v2080
        %v2113 = vpop.permute.xlu0 %2112
        %2116 = vset.pattern.permute.xlu0 0
        %2117 = vperm.xlu0 %2116, %v2081
        %v2118 = vpop.permute.xlu0 %2117
        %2121 = vset.pattern.permute.xlu0 0
        %2122 = vperm.xlu0 %2121, %v2082
        %v2123 = vpop.permute.xlu0 %2122
        %2126 = vset.pattern.permute.xlu0 0
        %2127 = vperm.xlu0 %2126, %v2083
        %v2128 = vpop.permute.xlu0 %2127
        %2131 = vset.pattern.permute.xlu0 0
        %2132 = vperm.xlu0 %2131, %v2084
        %v2133 = vpop.permute.xlu0 %2132
        %2136 = vset.pattern.permute.xlu0 0
        %2137 = vperm.xlu0 %2136, %v2085
        %v2138 = vpop.permute.xlu0 %2137
        %2141 = vset.pattern.permute.xlu0 0
        %2142 = vperm.xlu0 %2141, %v2086
        %v2143 = vpop.permute.xlu0 %2142
        %2146 = vset.pattern.permute.xlu0 0
        %2147 = vperm.xlu0 %2146, %v2087
        %v2148 = vpop.permute.xlu0 %2147
        %2151 = vset.pattern.permute.xlu0 0
        %2152 = vperm.xlu0 %2151, %v2088
        %v2153 = vpop.permute.xlu0 %2152
        %2156 = vset.pattern.permute.xlu0 0
        %2157 = vperm.xlu0 %2156, %v2089
        %v2158 = vpop.permute.xlu0 %2157
        %2161 = vset.pattern.permute.xlu0 0
        %2162 = vperm.xlu0 %2161, %v2090
        %v2163 = vpop.permute.xlu0 %2162
        %2166 = vset.pattern.permute.xlu0 0
        %2167 = vperm.xlu0 %2166, %v2091
        %v2168 = vpop.permute.xlu0 %2167
        %2171 = vset.pattern.permute.xlu0 0
        %2172 = vperm.xlu0 %2171, %v2092
        %v2173 = vpop.permute.xlu0 %2172
        %2176 = vset.pattern.permute.xlu0 0
        %2177 = vperm.xlu0 %2176, %v2093
        %v2178 = vpop.permute.xlu0 %2177
        %2181 = vset.pattern.permute.xlu0 0
        %2182 = vperm.xlu0 %2181, %v2094
        %v2183 = vpop.permute.xlu0 %2182
        %v2185 = vmul.f32 %v2041, %v2098
        %v2186 = vmul.f32 %v2042, %v2103
        %v2187 = vmul.f32 %v2043, %v2108
        %v2188 = vmul.f32 %v2044, %v2113
        %v2189 = vmul.f32 %v2045, %v2118
        %v2190 = vmul.f32 %v2046, %v2123
        %v2191 = vmul.f32 %v2047, %v2128
        %v2192 = vmul.f32 %v2048, %v2133
        %v2193 = vmul.f32 %v2049, %v2138
        %v2194 = vmul.f32 %v2050, %v2143
        %v2195 = vmul.f32 %v2051, %v2148
        %v2196 = vmul.f32 %v2052, %v2153
        %v2197 = vmul.f32 %v2053, %v2158
        %v2198 = vmul.f32 %v2054, %v2163
        %v2199 = vmul.f32 %v2055, %v2168
        %v2200 = vmul.f32 %v2056, %v2173
        %v2201 = vmul.f32 %v2057, %v2178
        %v2202 = vmul.f32 %v2058, %v2183
        %v2203 = vmul.f32 %v2059, %v2098
        %v2204 = vmul.f32 %v2060, %v2103
        %v2205 = vmul.f32 %v2061, %v2108
        %v2206 = vmul.f32 %v2062, %v2113
        %v2207 = vmul.f32 %v2063, %v2118
        %v2208 = vmul.f32 %v2064, %v2123
        %v2209 = vmul.f32 %v2065, %v2128
        %v2210 = vmul.f32 %v2066, %v2133
        %v2211 = vmul.f32 %v2067, %v2138
        %v2212 = vmul.f32 %v2068, %v2143
        %v2213 = vmul.f32 %v2069, %v2148
        %v2214 = vmul.f32 %v2070, %v2153
        %v2215 = vmul.f32 %v2071, %v2158
        %v2216 = vmul.f32 %v2072, %v2163
        %v2217 = vmul.f32 %v2073, %v2168
        %v2218 = vmul.f32 %v2074, %v2173
        %v2219 = vmul.f32 %v2075, %v2178
        %v2220 = vmul.f32 %v2076, %v2183
        %v2221 = vpack.c.bf16 %v2185, %v2185
        %v2222 = vpack.c.bf16 %v2186, %v2186
        %v2223 = vpack.c.bf16 %v2187, %v2187
        %v2224 = vpack.c.bf16 %v2188, %v2188
        %v2225 = vpack.c.bf16 %v2189, %v2189
        %v2226 = vpack.c.bf16 %v2190, %v2190
        %v2227 = vpack.c.bf16 %v2191, %v2191
        %v2228 = vpack.c.bf16 %v2192, %v2192
        %v2229 = vpack.c.bf16 %v2193, %v2193
        %v2230 = vpack.c.bf16 %v2194, %v2194
        %v2231 = vpack.c.bf16 %v2195, %v2195
        %v2232 = vpack.c.bf16 %v2196, %v2196
        %v2233 = vpack.c.bf16 %v2197, %v2197
        %v2234 = vpack.c.bf16 %v2198, %v2198
        %v2235 = vpack.c.bf16 %v2199, %v2199
        %v2236 = vpack.c.bf16 %v2200, %v2200
        %v2237 = vpack.c.bf16 %v2201, %v2201
        %v2238 = vpack.c.bf16 %v2202, %v2202
        %v2239 = vpack.c.bf16 %v2203, %v2203
        %v2240 = vpack.c.bf16 %v2204, %v2204
        %v2241 = vpack.c.bf16 %v2205, %v2205
        %v2242 = vpack.c.bf16 %v2206, %v2206
        %v2243 = vpack.c.bf16 %v2207, %v2207
        %v2244 = vpack.c.bf16 %v2208, %v2208
        %v2245 = vpack.c.bf16 %v2209, %v2209
        %v2246 = vpack.c.bf16 %v2210, %v2210
        %v2247 = vpack.c.bf16 %v2211, %v2211
        %v2248 = vpack.c.bf16 %v2212, %v2212
        %v2249 = vpack.c.bf16 %v2213, %v2213
        %v2250 = vpack.c.bf16 %v2214, %v2214
        %v2251 = vpack.c.bf16 %v2215, %v2215
        %v2252 = vpack.c.bf16 %v2216, %v2216
        %v2253 = vpack.c.bf16 %v2217, %v2217
        %v2254 = vpack.c.bf16 %v2218, %v2218
        %v2255 = vpack.c.bf16 %v2219, %v2219
        %v2256 = vpack.c.bf16 %v2220, %v2220
        %v2257 = vld [vmem:[%s2] sm:$0xf]
        %v2258 = vld [vmem:[%s2 + $0x4] sm:$0xf]
        %v2259 = vld [vmem:[%s2 + $0x8] sm:$0xf]
        %v2260 = vld [vmem:[%s2 + $0xc] sm:$0xf]
        %v2261 = vld [vmem:[%s2 + $0x10] sm:$0x3]
        %v2262 = vld [vmem:[%s3] sm:$0x1]
        %v2264 = vperm.slane %v2262, 0
        %v2302 = vunpack.c.l.b16 %v2221
        %v2303 = vunpack.c.l.b16 %v2222
        %v2304 = vunpack.c.l.b16 %v2223
        %v2305 = vunpack.c.l.b16 %v2224
        %v2306 = vunpack.c.l.b16 %v2225
        %v2307 = vunpack.c.l.b16 %v2226
        %v2308 = vunpack.c.l.b16 %v2227
        %v2309 = vunpack.c.l.b16 %v2228
        %v2310 = vunpack.c.l.b16 %v2229
        %v2311 = vunpack.c.l.b16 %v2230
        %v2312 = vunpack.c.l.b16 %v2231
        %v2313 = vunpack.c.l.b16 %v2232
        %v2314 = vunpack.c.l.b16 %v2233
        %v2315 = vunpack.c.l.b16 %v2234
        %v2316 = vunpack.c.l.b16 %v2235
        %v2317 = vunpack.c.l.b16 %v2236
        %v2318 = vunpack.c.l.b16 %v2237
        %v2319 = vunpack.c.l.b16 %v2238
        %v2320 = vunpack.c.l.b16 %v2239
        %v2321 = vunpack.c.l.b16 %v2240
        %v2322 = vunpack.c.l.b16 %v2241
        %v2323 = vunpack.c.l.b16 %v2242
        %v2324 = vunpack.c.l.b16 %v2243
        %v2325 = vunpack.c.l.b16 %v2244
        %v2326 = vunpack.c.l.b16 %v2245
        %v2327 = vunpack.c.l.b16 %v2246
        %v2328 = vunpack.c.l.b16 %v2247
        %v2329 = vunpack.c.l.b16 %v2248
        %v2330 = vunpack.c.l.b16 %v2249
        %v2331 = vunpack.c.l.b16 %v2250
        %v2332 = vunpack.c.l.b16 %v2251
        %v2333 = vunpack.c.l.b16 %v2252
        %v2334 = vunpack.c.l.b16 %v2253
        %v2335 = vunpack.c.l.b16 %v2254
        %v2336 = vunpack.c.l.b16 %v2255
        %v2337 = vunpack.c.l.b16 %v2256
        %v2338 = vpack.c.b16 %v2303, %v2302
        %v2339 = vpack.c.b16 %v2305, %v2304
        %v2340 = vpack.c.b16 %v2307, %v2306
        %v2341 = vpack.c.b16 %v2309, %v2308
        %v2342 = vpack.c.b16 %v2311, %v2310
        %v2343 = vpack.c.b16 %v2313, %v2312
        %v2344 = vpack.c.b16 %v2315, %v2314
        %v2345 = vpack.c.b16 %v2317, %v2316
        %v2346 = vpack.c.b16 %v2319, %v2318
        %v2347 = vpack.c.b16 %v2321, %v2320
        %v2348 = vpack.c.b16 %v2323, %v2322
        %v2349 = vpack.c.b16 %v2325, %v2324
        %v2350 = vpack.c.b16 %v2327, %v2326
        %v2351 = vpack.c.b16 %v2329, %v2328
        %v2352 = vpack.c.b16 %v2331, %v2330
        %v2353 = vpack.c.b16 %v2333, %v2332
        %v2354 = vpack.c.b16 %v2335, %v2334
        %v2355 = vpack.c.b16 %v2337, %v2336
        %v2361 = vunpack.c.l.b16 %v2257
        %v2362 = vunpack.c.l.b16 %v2258
        %v2363 = vunpack.c.l.b16 %v2259
        %v2364 = vunpack.c.l.b16 %v2260
        %v2365 = vunpack.c.l.b16 %v2261
        %v2366 = vpack.c.b16 %v2362, %v2361
        %v2367 = vpack.c.b16 %v2364, %v2363
        %v2368 = vpack.c.b16 %v2365, %v2365
        %vm2371 = vcmask 293888
        %v2373 = vsel %vm2371, %v2338, 0
        %v2376 = vsel %vm2371, %v2339, 0
        %v2379 = vsel %vm2371, %v2340, 0
        %v2382 = vsel %vm2371, %v2341, 0
        %v2385 = vsel %vm2371, %v2342, 0
        %v2388 = vsel %vm2371, %v2343, 0
        %v2391 = vsel %vm2371, %v2344, 0
        %v2394 = vsel %vm2371, %v2345, 0
        %v2397 = vsel %vm2371, %v2346, 0
        %v2400 = vsel %vm2371, %v2347, 0
        %v2403 = vsel %vm2371, %v2348, 0
        %v2406 = vsel %vm2371, %v2349, 0
        %v2409 = vsel %vm2371, %v2350, 0
        %v2412 = vsel %vm2371, %v2351, 0
        %v2415 = vsel %vm2371, %v2352, 0
        %v2418 = vsel %vm2371, %v2353, 0
        %v2421 = vsel %vm2371, %v2354, 0
        %v2424 = vsel %vm2371, %v2355, 0
        %vm2426 = vcmask 1041408
        %v2428 = vsel %vm2426, %v2368, 0
        %2430 = vmatpush.bf16.msra.mxu0 0
        %2431 = vmatpush.bf16.msra.mxu0 0
        %2432 = vmatpush.bf16.msra.mxu0 0
        %2433 = vmatpush.bf16.msra.mxu0 0
        %2434 = vmatpush.bf16.msra.mxu0 0
        %2435 = vmatpush.bf16.msra.mxu0 %v2428
        %2436 = vmatpush.bf16.msra.mxu0 %v2367
        %2437 = vmatpush.bf16.msra.mxu0 %v2366
        %2438 = vmatmul.bf16.gmra.mxu0 %v2373
        %v2439 = vpop.f32.mrf.mxu0
        %v2440 = vadd.f32 %v2264, %v2439
        %v2441 = vpop.f32.mrf.mxu0
        %v2442 = vadd.f32 %v2264, %v2441
        %2443 = vmatmul.bf16.gmra.mxu0 %v2376
        %v2444 = vpop.f32.mrf.mxu0
        %v2445 = vadd.f32 %v2264, %v2444
        %v2446 = vpop.f32.mrf.mxu0
        %v2447 = vadd.f32 %v2264, %v2446
        %2448 = vmatmul.bf16.gmra.mxu0 %v2379
        %v2449 = vpop.f32.mrf.mxu0
        %v2450 = vadd.f32 %v2264, %v2449
        %v2451 = vpop.f32.mrf.mxu0
        %v2452 = vadd.f32 %v2264, %v2451
        %2453 = vmatmul.bf16.gmra.mxu0 %v2382
        %v2454 = vpop.f32.mrf.mxu0
        %v2455 = vadd.f32 %v2264, %v2454
        %v2456 = vpop.f32.mrf.mxu0
        %v2457 = vadd.f32 %v2264, %v2456
        %2458 = vmatmul.bf16.gmra.mxu0 %v2385
        %v2459 = vpop.f32.mrf.mxu0
        %v2460 = vadd.f32 %v2264, %v2459
        %v2461 = vpop.f32.mrf.mxu0
        %v2462 = vadd.f32 %v2264, %v2461
        %2463 = vmatmul.bf16.gmra.mxu0 %v2388
        %v2464 = vpop.f32.mrf.mxu0
        %v2465 = vadd.f32 %v2264, %v2464
        %v2466 = vpop.f32.mrf.mxu0
        %v2467 = vadd.f32 %v2264, %v2466
        %2468 = vmatmul.bf16.gmra.mxu0 %v2391
        %v2469 = vpop.f32.mrf.mxu0
        %v2470 = vadd.f32 %v2264, %v2469
        %v2471 = vpop.f32.mrf.mxu0
        %v2472 = vadd.f32 %v2264, %v2471
        %2473 = vmatmul.bf16.gmra.mxu0 %v2394
        %v2474 = vpop.f32.mrf.mxu0
        %v2475 = vadd.f32 %v2264, %v2474
        %v2476 = vpop.f32.mrf.mxu0
        %v2477 = vadd.f32 %v2264, %v2476
        %2478 = vmatmul.bf16.gmra.mxu0 %v2397
        %v2479 = vpop.f32.mrf.mxu0
        %v2480 = vadd.f32 %v2264, %v2479
        %v2481 = vpop.f32.mrf.mxu0
        %v2482 = vadd.f32 %v2264, %v2481
        %2483 = vmatmul.bf16.gmra.mxu0 %v2400
        %v2484 = vpop.f32.mrf.mxu0
        %v2485 = vadd.f32 %v2264, %v2484
        %v2486 = vpop.f32.mrf.mxu0
        %v2487 = vadd.f32 %v2264, %v2486
        %2488 = vmatmul.bf16.gmra.mxu0 %v2403
        %v2489 = vpop.f32.mrf.mxu0
        %v2490 = vadd.f32 %v2264, %v2489
        %v2491 = vpop.f32.mrf.mxu0
        %v2492 = vadd.f32 %v2264, %v2491
        %2493 = vmatmul.bf16.gmra.mxu0 %v2406
        %v2494 = vpop.f32.mrf.mxu0
        %v2495 = vadd.f32 %v2264, %v2494
        %v2496 = vpop.f32.mrf.mxu0
        %v2497 = vadd.f32 %v2264, %v2496
        %2498 = vmatmul.bf16.gmra.mxu0 %v2409
        %v2499 = vpop.f32.mrf.mxu0
        %v2500 = vadd.f32 %v2264, %v2499
        %v2501 = vpop.f32.mrf.mxu0
        %v2502 = vadd.f32 %v2264, %v2501
        %2503 = vmatmul.bf16.gmra.mxu0 %v2412
        %v2504 = vpop.f32.mrf.mxu0
        %v2505 = vadd.f32 %v2264, %v2504
        %v2506 = vpop.f32.mrf.mxu0
        %v2507 = vadd.f32 %v2264, %v2506
        %2508 = vmatmul.bf16.gmra.mxu0 %v2415
        %v2509 = vpop.f32.mrf.mxu0
        %v2510 = vadd.f32 %v2264, %v2509
        %v2511 = vpop.f32.mrf.mxu0
        %v2512 = vadd.f32 %v2264, %v2511
        %2513 = vmatmul.bf16.gmra.mxu0 %v2418
        %v2514 = vpop.f32.mrf.mxu0
        %v2515 = vadd.f32 %v2264, %v2514
        %v2516 = vpop.f32.mrf.mxu0
        %v2517 = vadd.f32 %v2264, %v2516
        %2518 = vmatmul.bf16.gmra.mxu0 %v2421
        %v2519 = vpop.f32.mrf.mxu0
        %v2520 = vadd.f32 %v2264, %v2519
        %v2521 = vpop.f32.mrf.mxu0
        %v2522 = vadd.f32 %v2264, %v2521
        %2523 = vmatmul.bf16.gmra.mxu0 %v2424
        %v2524 = vpop.f32.mrf.mxu0
        %v2525 = vadd.f32 %v2264, %v2524
        %v2526 = vpop.f32.mrf.mxu0
        %v2527 = vadd.f32 %v2264, %v2526
        %2528 = vdwg.mxu0
        %v2529 = vmax.f32 %v2440, 0.0
        %v2530 = vmax.f32 %v2442, 0.0
        %v2531 = vmax.f32 %v2445, 0.0
        %v2532 = vmax.f32 %v2447, 0.0
        %v2533 = vmax.f32 %v2450, 0.0
        %v2534 = vmax.f32 %v2452, 0.0
        %v2535 = vmax.f32 %v2455, 0.0
        %v2536 = vmax.f32 %v2457, 0.0
        %v2537 = vmax.f32 %v2460, 0.0
        %v2538 = vmax.f32 %v2462, 0.0
        %v2539 = vmax.f32 %v2465, 0.0
        %v2540 = vmax.f32 %v2467, 0.0
        %v2541 = vmax.f32 %v2470, 0.0
        %v2542 = vmax.f32 %v2472, 0.0
        %v2543 = vmax.f32 %v2475, 0.0
        %v2544 = vmax.f32 %v2477, 0.0
        %v2545 = vmax.f32 %v2480, 0.0
        %v2546 = vmax.f32 %v2482, 0.0
        %v2547 = vmax.f32 %v2485, 0.0
        %v2548 = vmax.f32 %v2487, 0.0
        %v2549 = vmax.f32 %v2490, 0.0
        %v2550 = vmax.f32 %v2492, 0.0
        %v2551 = vmax.f32 %v2495, 0.0
        %v2552 = vmax.f32 %v2497, 0.0
        %v2553 = vmax.f32 %v2500, 0.0
        %v2554 = vmax.f32 %v2502, 0.0
        %v2555 = vmax.f32 %v2505, 0.0
        %v2556 = vmax.f32 %v2507, 0.0
        %v2557 = vmax.f32 %v2510, 0.0
        %v2558 = vmax.f32 %v2512, 0.0
        %v2559 = vmax.f32 %v2515, 0.0
        %v2560 = vmax.f32 %v2517, 0.0
        %v2561 = vmax.f32 %v2520, 0.0
        %v2562 = vmax.f32 %v2522, 0.0
        %v2563 = vmax.f32 %v2525, 0.0
        %v2564 = vmax.f32 %v2527, 0.0
        %v2565 = vld [vmem:[#allocation2] sm:$0x3]
        %v2566 = vadd.f32 %v2529, %v2530
        %v2567 = vadd.f32 %v2566, %v2531
        %v2568 = vadd.f32 %v2567, %v2532
        %v2569 = vadd.f32 %v2568, %v2533
        %v2570 = vadd.f32 %v2569, %v2534
        %v2571 = vadd.f32 %v2570, %v2535
        %v2572 = vadd.f32 %v2571, %v2536
        %v2573 = vadd.f32 %v2572, %v2537
        %v2574 = vadd.f32 %v2573, %v2538
        %v2575 = vadd.f32 %v2574, %v2539
        %v2576 = vadd.f32 %v2575, %v2540
        %v2577 = vadd.f32 %v2576, %v2541
        %v2578 = vadd.f32 %v2577, %v2542
        %v2579 = vadd.f32 %v2578, %v2543
        %v2580 = vadd.f32 %v2579, %v2544
        %v2581 = vadd.f32 %v2580, %v2545
        %v2582 = vadd.f32 %v2581, %v2546
        %v2583 = vrot.slane %v2582, 4
        %v2584 = vadd.f32 %v2582, %v2583
        %v2585 = vrot.slane %v2584, 2
        %v2586 = vadd.f32 %v2584, %v2585
        %v2587 = vrot.slane %v2586, 1
        %v2588 = vadd.f32 %v2586, %v2587
        %v2589 = vadd.f32 %v2547, %v2548
        %v2590 = vadd.f32 %v2589, %v2549
        %v2591 = vadd.f32 %v2590, %v2550
        %v2592 = vadd.f32 %v2591, %v2551
        %v2593 = vadd.f32 %v2592, %v2552
        %v2594 = vadd.f32 %v2593, %v2553
        %v2595 = vadd.f32 %v2594, %v2554
        %v2596 = vadd.f32 %v2595, %v2555
        %v2597 = vadd.f32 %v2596, %v2556
        %v2598 = vadd.f32 %v2597, %v2557
        %v2599 = vadd.f32 %v2598, %v2558
        %v2600 = vadd.f32 %v2599, %v2559
        %v2601 = vadd.f32 %v2600, %v2560
        %v2602 = vadd.f32 %v2601, %v2561
        %v2603 = vadd.f32 %v2602, %v2562
        %v2604 = vadd.f32 %v2603, %v2563
        %v2605 = vadd.f32 %v2604, %v2564
        %v2606 = vrot.slane %v2605, 4
        %v2607 = vadd.f32 %v2605, %v2606
        %v2608 = vrot.slane %v2607, 2
        %v2609 = vadd.f32 %v2607, %v2608
        %v2610 = vrot.slane %v2609, 1
        %v2611 = vadd.f32 %v2609, %v2610
        %vm2614 = vcmask 1041409
        %v2615 = vsel %vm2614, %v2611, %v2588
        %v2617 = vadd.f32 %v2565, %v2615
        %2618 = vst [vmem:[#allocation2] sm:$0x3] %v2617
        %p2619 = scmp.eq.s32.totalorder %s23, 1
        // Predicated region
        $region49: #{base_model_forward.1} parent=43 // pred_check
          %p2620 = pneg %p2619
        $region50: #{base_model_forward.1} parent=43 // pred_check_branch
          %2622 = sbr.rel (%p2620) target = $region52
        $region51: #{base_model_forward.1} parent=43 // pred_region
          %v2623 = vld [vmem:[%s3] sm:$0x1]
          %v2624 = vmax.f32 %v2623, 0.0
          %v2625 = vld [vmem:[#allocation2] sm:$0x3]
          %v2626 = vmul.f32 %v2624, 32.0
          %v2628 = vperm.slane %v2626, 0
          %v2630 = vsub.f32 %v2625, %v2628
          %v2631 = vmul.f32 %v2630, 0.00390625
          %v2632 = vpack.c.bf16 %v2631, %v2631
          %v2633 = vld [vmem:[%s4] sm:$0xf]
          %v2634 = vld [vmem:[%s4 + $0x4] sm:$0xf]
          %v2635 = vld [vmem:[%s4 + $0x8] sm:$0xf]
          %v2636 = vld [vmem:[%s4 + $0xc] sm:$0xf]
          %v2637 = vld [vmem:[%s4 + $0x10] sm:$0xf]
          %v2638 = vld [vmem:[%s4 + $0x14] sm:$0xf]
          %v2639 = vld [vmem:[%s4 + $0x18] sm:$0xf]
          %v2640 = vld [vmem:[%s4 + $0x1c] sm:$0xf]
          %v2641 = vld [vmem:[%s4 + $0x20] sm:$0xf]
          %v2642 = vld [vmem:[%s4 + $0x24] sm:$0xf]
          %v2643 = vld [vmem:[%s4 + $0x28] sm:$0xf]
          %v2644 = vld [vmem:[%s4 + $0x2c] sm:$0xf]
          %v2645 = vld [vmem:[%s4 + $0x30] sm:$0xf]
          %v2646 = vld [vmem:[%s4 + $0x34] sm:$0xf]
          %v2647 = vld [vmem:[%s4 + $0x38] sm:$0xf]
          %v2648 = vld [vmem:[%s4 + $0x3c] sm:$0xf]
          %v2649 = vld [vmem:[%s5] sm:$0x1]
          %v2651 = vperm.slane %v2649, 0
          %v2669 = vunpack.c.l.b16 %v2633
          %v2670 = vunpack.c.l.b16 %v2634
          %v2671 = vunpack.c.l.b16 %v2635
          %v2672 = vunpack.c.l.b16 %v2636
          %v2673 = vunpack.c.l.b16 %v2637
          %v2674 = vunpack.c.l.b16 %v2638
          %v2675 = vunpack.c.l.b16 %v2639
          %v2676 = vunpack.c.l.b16 %v2640
          %v2677 = vunpack.c.l.b16 %v2641
          %v2678 = vunpack.c.l.b16 %v2642
          %v2679 = vunpack.c.l.b16 %v2643
          %v2680 = vunpack.c.l.b16 %v2644
          %v2681 = vunpack.c.l.b16 %v2645
          %v2682 = vunpack.c.l.b16 %v2646
          %v2683 = vunpack.c.l.b16 %v2647
          %v2684 = vunpack.c.l.b16 %v2648
          %v2685 = vpack.c.b16 %v2670, %v2669
          %v2686 = vpack.c.b16 %v2672, %v2671
          %v2687 = vpack.c.b16 %v2674, %v2673
          %v2688 = vpack.c.b16 %v2676, %v2675
          %v2689 = vpack.c.b16 %v2678, %v2677
          %v2690 = vpack.c.b16 %v2680, %v2679
          %v2691 = vpack.c.b16 %v2682, %v2681
          %v2692 = vpack.c.b16 %v2684, %v2683
          %2701 = vmatpush.bf16.msra.mxu0 %v2692
          %2702 = vmatpush.bf16.msra.mxu0 %v2691
          %2703 = vmatpush.bf16.msra.mxu0 %v2690
          %2704 = vmatpush.bf16.msra.mxu0 %v2689
          %2705 = vmatpush.bf16.msra.mxu0 %v2688
          %2706 = vmatpush.bf16.msra.mxu0 %v2687
          %2707 = vmatpush.bf16.msra.mxu0 %v2686
          %2708 = vmatpush.bf16.msra.mxu0 %v2685
          %2709 = vmatmul.bf16.gmra.mxu0 %v2632
          %v2710 = vpop.f32.mrf.mxu0
          %v2711 = vadd.f32 %v2651, %v2710
          %v2712 = vpop.f32.mrf.mxu0
          %2713 = vdwg.mxu0
          %2714 = vst [vmem:[#allocation3] sm:$0x3] %v2711
        $region52: #{base_model_forward.1} parent=43 // pred_fallthru
          _
        // Predicated region
        $region53: #{base_model_forward.1} parent=43 // pred_check
          %p2715 = pneg %p184
        $region54: #{base_model_forward.1} parent=43 // pred_check_branch
          %2717 = sbr.rel (%p2715) target = $region56
        $region55: #{base_model_forward.1} parent=43 // pred_region
          %2719 = vsyncadd [#allocation4], 0
          %s2720 = smul.addr %s22, 2
          %s2721 = scalar_lea.hbm %s6, %s2720
          %s2723 = sshll.u32 [#allocation3], 4
          %s2724 = int_to_ptr.vmem [resolvable:$true] %s2723
          %s2725 = sshll.u32 %s2721, 4
          %s2726 = int_to_ptr.hbm [resolvable:$true] %s2725
          %2728 = dma.vmem_to_hbm [thread:$0]  %s2724, 32, %s2726, [#allocation4]
        $region56: #{base_model_forward.1} parent=43 // pred_fallthru
          _
        // Predicated region
        $region57: #{base_model_forward.1} parent=43 // pred_check
          %p2729 = pneg %p184
        $region58: #{base_model_forward.1} parent=43 // pred_check_branch
          %2731 = sbr.rel (%p2729) target = $region60
        $region59: #{base_model_forward.1} parent=43 // pred_region
          %2733 = dma.done [#allocation4], 32
        $region60: #{base_model_forward.1} parent=43 // pred_fallthru
          _
      $region44: #{base_model_forward.1} parent=5 // pred_fallthru
        _
      %p2734 = scmp.le.s32.totalorder 2, %s13
      // Predicated region
      $region61: #{base_model_forward.1} parent=5 // pred_check
        %p2735 = pneg %p2734
      $region62: #{base_model_forward.1} parent=5 // pred_check_branch
        %2737 = sbr.rel (%p2735) target = $region64
      $region63: #{base_model_forward.1} parent=5 // pred_region
        %s2738 = ssub.s32 %s13, 2
      $region64: #{base_model_forward.1} parent=5 // pred_fallthru
        _
    $region6: #{base_model_forward.1} parent=1 // loop_footer
      %s17 = sadd.s32 1, %s13
    $region7: #{base_model_forward.1} parent=1 // loop_footer_branch
      %12 = sbr.rel target = $region3
    $region8: #{base_model_forward.1} parent=1 // loop_exit
      _
    %2739 = vsyncpa [#allocation4], 1
    %s2740 = scalar_lea.sflag [#allocation4], 1
    %2741 = vsyncpa %s2740, 1

</llo_original>
